<compile_context>
chip_gen: v6e
topology: v6e:2x2x1
jax: 0.10.0
libtpu: 0.0.40
codegen_flags: <defaults>
</compile_context>

<pallas_src>
import jax
import jax.numpy as jnp
from jax import lax
from jax.experimental import pallas as pl
from jax.experimental.pallas import tpu as pltpu

EPS = 1e-5  # BatchNorm1d default eps


# ---------------------------------------------------------------------------
# Fused kernel: txt-sum -> lin1 -> analytic BN -> outer product -> 3x conv1x1+ReLU -> lin2
# ---------------------------------------------------------------------------
def _fused_kernel(txt_ref, img_ref, w1_ref, wc1_ref, wc2_ref, wc3_ref, w2_ref,
                  vec_ref, out_ref):
    bs, _, T = txt_ref.shape
    d1 = w1_ref.shape[1]
    out_pad = out_ref.shape[1]

    # txt_sum[b, t] = sum_s txt[b, s, t]   (sublane reduce, T stays in lanes)
    txt_sum = jnp.sum(txt_ref[...], axis=1)                        # (bs, T)

    # lin1 applied once to the pooled image (it is constant across seq)
    img_l0 = jnp.dot(img_ref[...], w1_ref[...],
                     preferred_element_type=jnp.float32)
    img_l0 = img_l0 + vec_ref[0:1, :d1]                            # (bs, d1)

    # ---- BatchNorm1d(T) batch stats, analytically from the rank-1 factors ----
    # x[(b,d), t] = img_l0[b,d] * txt_sum[b,t]; stats are over the (b,d) rows.
    inv_n = 1.0 / float(bs * d1)
    s1 = jnp.sum(img_l0, axis=1, keepdims=True)                    # (bs, 1)
    s2 = jnp.sum(img_l0 * img_l0, axis=1, keepdims=True)           # (bs, 1)
    mean = jnp.sum(s1 * txt_sum, axis=0, keepdims=True) * inv_n    # (1, T)
    ex2 = jnp.sum(s2 * (txt_sum * txt_sum), axis=0, keepdims=True) * inv_n
    var = jnp.maximum(ex2 - mean * mean, 0.0)                      # biased variance
    gamma = vec_ref[1:2, :T]
    beta = vec_ref[2:3, :T]
    scale = gamma * lax.rsqrt(var + EPS)                           # (1, T)
    shift = beta - mean * scale                                    # (1, T)

    # Fold BN: per-lane scale into txt_sum, per-lane shift into conv1's bias.
    txt_s = txt_sum * scale                                        # (bs, T)
    b1_s = jnp.dot(shift, wc1_ref[...],
                   preferred_element_type=jnp.float32) + vec_ref[3:4, :T]

    # per-batch rank-1 outer product; rows = (b, d1), lanes = T
    mm = img_l0[:, :, None] * txt_s[:, None, :]                    # (bs, d1, T)
    x = mm.reshape(bs * d1, T)                                     # (bs*d1, T)

    # 3 x (Conv1d(T, T, kernel_size=1) + ReLU) == lane-dense 2D MXU matmuls.
    x = jnp.maximum(
        jnp.dot(x, wc1_ref[...], preferred_element_type=jnp.float32) + b1_s, 0.0)
    x = jnp.maximum(
        jnp.dot(x, wc2_ref[...], preferred_element_type=jnp.float32)
        + vec_ref[4:5, :T], 0.0)
    x = jnp.maximum(
        jnp.dot(x, wc3_ref[...], preferred_element_type=jnp.float32)
        + vec_ref[5:6, :T], 0.0)

    # lin2 without a lane-merging reshape:
    #   out[b, :] = sum_d  x3[b, d, :] @ w2p[d*T:(d+1)*T, :]
    x3 = x.reshape(bs, d1, T)
    acc = jnp.zeros((bs, out_pad), jnp.float32)
    for d in range(d1):                                            # static unroll
        acc = acc + jnp.dot(x3[:, d, :], w2_ref[d * T:(d + 1) * T, :],
                            preferred_element_type=jnp.float32)
    out_ref[...] = acc + vec_ref[6:7, :out_pad]                    # lane-dense store


def _full_spec(shape):
    nd = len(shape)
    return pl.BlockSpec(shape, lambda i, _n=nd: (0,) * _n)


# ---------------------------------------------------------------------------
# One-time parameter preparation (hoisted out of the forward path)
# ---------------------------------------------------------------------------
def prepare_params(params, *, out_block=128):
    (w1_t, b1, gamma, beta, wc1_t, bc1, wc2_t, bc2, wc3_t, bc3, w2_t, b2) = params
    d1 = w1_t.shape[1]
    T = gamma.shape[1]
    out_dim = w2_t.shape[1]
    out_pad = pl.cdiv(out_dim, out_block) * out_block              # lane-dense output

    # pack the tiny per-channel vectors into one VMEM array -> one DMA
    P = max(d1, T, out_pad)
    vecs = jnp.zeros((8, P), jnp.float32)
    vecs = vecs.at[0, :d1].set(b1[0])
    vecs = vecs.at[1, :T].set(gamma[0])
    vecs = vecs.at[2, :T].set(beta[0])
    vecs = vecs.at[3, :T].set(bc1[0])
    vecs = vecs.at[4, :T].set(bc2[0])
    vecs = vecs.at[5, :T].set(bc3[0])
    vecs = vecs.at[6, :out_dim].set(b2[0])

    # permute w2 rows from PyTorch's (T-major, d1-minor) flatten to our
    # (d1-major, T-minor) order and pad the output columns to a multiple of 128.
    w2p = w2_t.reshape(T, d1, out_dim).transpose(1, 0, 2).reshape(d1 * T, out_dim)
    w2p = jnp.pad(w2p, ((0, 0), (0, out_pad - out_dim)))

    return dict(w1=w1_t, wc1=wc1_t, wc2=wc2_t, wc3=wc3_t, w2p=w2p, vecs=vecs,
                T=T, d1=d1, out_dim=out_dim, out_pad=out_pad)


# ---------------------------------------------------------------------------
# Forward pass
# ---------------------------------------------------------------------------
def multiplication_fusion(txt, img, prep):
    """Forward pass of MultiplicationFusion (resnet branch). img is NCHW."""
    bs, i_dim, nw, nh = img.shape
    if not (nw == 1 and nh == 1):
        # nn.AvgPool2d((3,3), stride=(15,20), padding=(1,1)), count_include_pad=True
        # TODO(synk): avg-pool stays as an XLA reduce_window outside the Pallas kernel.
        s = lax.reduce_window(img, 0.0, lax.add,
                              window_dimensions=(1, 1, 3, 3),
                              window_strides=(1, 1, 15, 20),
                              padding=((0, 0), (0, 0), (1, 1), (1, 1)))
        img = s / 9.0
    # the module's matmul only type-checks when the pooled spatial extent is (1, 1)
    assert img.shape[2] == 1 and img.shape[3] == 1, img.shape
    img2d = img.reshape(bs, i_dim)                                 # pooled (bs, img_dim)

    out_pad = prep["out_pad"]
    inputs = (txt, img2d, prep["w1"], prep["wc1"], prep["wc2"], prep["wc3"],
              prep["w2p"], prep["vecs"])
    out_p = pl.pallas_call(
        _fused_kernel,
        grid=(1,),
        in_specs=[_full_spec(a.shape) for a in inputs],
        out_specs=_full_spec((bs, out_pad)),
        out_shape=jax.ShapeDtypeStruct((bs, out_pad), jnp.float32),
        compiler_params=pltpu.CompilerParams(
            dimension_semantics=("arbitrary",)),
    )(*inputs)
    return out_p[:, :prep["out_dim"]]


# ---------------------------------------------------------------------------
# Synthetic params + pure-JAX reference (literal replica of the PyTorch forward)
# ---------------------------------------------------------------------------
def init_params(key, text_dim, img_dim):
    """Deterministic synthetic params (shapes follow the module's __init__, resnet)."""
    d1 = img_dim // 8
    fusion_out = img_dim + text_dim
    ks = jax.random.split(key, 10)

    def w(k, shape, scale=0.1):
        return (scale * jax.random.normal(k, shape)).astype(jnp.float32)

    w1 = w(ks[0], (d1, img_dim))                       # nn.Linear(img_dim, d1).weight
    b1 = w(ks[1], (1, d1))
    gamma = jnp.ones((1, text_dim), jnp.float32)       # BatchNorm1d default affine init
    beta = jnp.zeros((1, text_dim), jnp.float32)
    wc1 = w(ks[2], (text_dim, text_dim)); bc1 = w(ks[3], (1, text_dim))
    wc2 = w(ks[4], (text_dim, text_dim)); bc2 = w(ks[5], (1, text_dim))
    wc3 = w(ks[6], (text_dim, text_dim)); bc3 = w(ks[7], (1, text_dim))
    w2 = w(ks[8], (fusion_out, d1 * text_dim))         # nn.Linear(d1*text_dim, fusion_out)
    b2 = w(ks[9], (1, fusion_out))
    # pre-transpose all weights to (in, out) for the kernel
    return (w1.T, b1, gamma, beta, wc1.T, bc1, wc2.T, bc2, wc3.T, bc3, w2.T, b2)


def reference(txt, img, params):
    """Pure-JAX replica of the PyTorch forward (training-mode BN), for validation."""
    bs, i_dim, nw, nh = img.shape
    if not (nw == 1 and nh == 1):
        s = lax.reduce_window(img, 0.0, lax.add,
                              window_dimensions=(1, 1, 3, 3),
                              window_strides=(1, 1, 15, 20),
                              padding=((0, 0), (0, 0), (1, 1), (1, 1)))
        img = s / 9.0
    img = jnp.squeeze(img, axis=-1)
    seq = txt.shape[1]
    img = jnp.tile(img, (1, 1, seq))
    img_p = jnp.transpose(img, (0, 2, 1))
    txt_p = jnp.transpose(txt, (0, 2, 1))
    (w1_t, b1, gamma, beta, wc1_t, bc1, wc2_t, bc2, wc3_t, bc3, w2_t, b2) = params
    img_l = img_p @ w1_t + b1[0]
    mm = jnp.einsum('bts,bsd->btd', txt_p, img_l)
    mean = mm.mean(axis=(0, 2), keepdims=True)
    var = ((mm - mean) ** 2).mean(axis=(0, 2), keepdims=True)
    mm = (mm - mean) / jnp.sqrt(var + EPS) * gamma[..., None] + beta[..., None]
    for wt, bc in ((wc1_t, bc1), (wc2_t, bc2), (wc3_t, bc3)):
        mm = jnp.einsum('bcl,co->bol', mm, wt) + bc[..., None]
        mm = jnp.maximum(mm, 0.0)
    flat = mm.reshape(bs, -1)
    return flat @ w2_t + b2


if __name__ == "__main__":
    key = jax.random.PRNGKey(0)
    bs, seq, text_dim, img_dim = 2, 8, 32, 64
    k_txt, k_img, k_p = jax.random.split(key, 3)
    txt = jax.random.normal(k_txt, (bs, seq, text_dim), jnp.float32)
    # NCHW image features; (15, 20) spatial pools to (1, 1) with the module's AvgPool2d
    img = jax.random.normal(k_img, (bs, img_dim, 15, 20), jnp.float32)
    params = init_params(k_p, text_dim, img_dim)
    prep = prepare_params(params)          # one-time weight repack (hoisted)

    out = multiplication_fusion(txt, img, prep)
    out = jax.block_until_ready(out)

    ref = reference(txt, img, params)
    assert out.shape == (bs, img_dim + text_dim), out.shape
    assert jnp.allclose(out, ref, atol=1e-4, rtol=1e-4), float(jnp.max(jnp.abs(out - ref)))
    print("KERNEL_OK")
</pallas_src>

<mosaic_0001>
module attributes {stable_mosaic.version = 11 : i64} {
  func.func @_fused_kernel(%arg0: i32, %arg1: memref<2x8x32xf32, #tpu.memory_space<vmem>>, %arg2: memref<2x64xf32, #tpu.memory_space<vmem>>, %arg3: memref<64x8xf32, #tpu.memory_space<vmem>>, %arg4: memref<32x32xf32, #tpu.memory_space<vmem>>, %arg5: memref<32x32xf32, #tpu.memory_space<vmem>>, %arg6: memref<32x32xf32, #tpu.memory_space<vmem>>, %arg7: memref<256x128xf32, #tpu.memory_space<vmem>>, %arg8: memref<8x128xf32, #tpu.memory_space<vmem>>, %arg9: memref<2x128xf32, #tpu.memory_space<vmem>>) attributes {dimension_semantics = [#tpu.dimension_semantics<arbitrary>], iteration_bounds = array<i64: 1>, scalar_prefetch = 0 : i64, scratch_operands = 0 : i64, tpu.core_type = #tpu.core_type<tc>, window_params = [{pipeline_mode = #tpu.pipeline_mode<synchronous>, transform_indices = @transform_0, window_bounds = array<i64: 2, 8, 32>}, {pipeline_mode = #tpu.pipeline_mode<synchronous>, transform_indices = @transform_1, window_bounds = array<i64: 2, 64>}, {pipeline_mode = #tpu.pipeline_mode<synchronous>, transform_indices = @transform_2, window_bounds = array<i64: 64, 8>}, {pipeline_mode = #tpu.pipeline_mode<synchronous>, transform_indices = @transform_3, window_bounds = array<i64: 32, 32>}, {pipeline_mode = #tpu.pipeline_mode<synchronous>, transform_indices = @transform_4, window_bounds = array<i64: 32, 32>}, {pipeline_mode = #tpu.pipeline_mode<synchronous>, transform_indices = @transform_5, window_bounds = array<i64: 32, 32>}, {pipeline_mode = #tpu.pipeline_mode<synchronous>, transform_indices = @transform_6, window_bounds = array<i64: 256, 128>}, {pipeline_mode = #tpu.pipeline_mode<synchronous>, transform_indices = @transform_7, window_bounds = array<i64: 8, 128>}, {pipeline_mode = #tpu.pipeline_mode<synchronous>, transform_indices = @transform_8, window_bounds = array<i64: 2, 128>}]} {
    %c0 = arith.constant 0 : index
    %c0_0 = arith.constant 0 : index
    %c0_1 = arith.constant 0 : index
    %0 = vector.load %arg1[%c0, %c0_0, %c0_1] : memref<2x8x32xf32, #tpu.memory_space<vmem>>, vector<2x8x32xf32>
    %cst = arith.constant dense<0.000000e+00> : vector<2x32xf32>
    %1 = vector.multi_reduction <add>, %0, %cst [1] : vector<2x8x32xf32> to vector<2x32xf32>
    %c0_2 = arith.constant 0 : index
    %c0_3 = arith.constant 0 : index
    %2 = vector.load %arg2[%c0_2, %c0_3] : memref<2x64xf32, #tpu.memory_space<vmem>>, vector<2x64xf32>
    %c0_4 = arith.constant 0 : index
    %c0_5 = arith.constant 0 : index
    %3 = vector.load %arg3[%c0_4, %c0_5] : memref<64x8xf32, #tpu.memory_space<vmem>>, vector<64x8xf32>
    %cst_6 = arith.constant dense<0.000000e+00> : vector<2x8xf32>
    %4 = tpu.matmul %2, %3, %cst_6 {dimension_numbers = #tpu.dot_dimension_numbers<[1], [0], [0], [1], [0, 0, 1, 1], [], []>} : vector<2x64xf32>, vector<64x8xf32>, vector<2x8xf32> -> vector<2x8xf32>
    %c0_7 = arith.constant 0 : index
    %c0_8 = arith.constant 0 : index
    %5 = vector.load %arg8[%c0_7, %c0_8] : memref<8x128xf32, #tpu.memory_space<vmem>>, vector<1x8xf32>
    %6 = vector.broadcast %5 : vector<1x8xf32> to vector<2x8xf32>
    %7 = arith.addf %4, %6 : vector<2x8xf32>
    %cst_9 = arith.constant dense<0.000000e+00> : vector<2xf32>
    %8 = vector.multi_reduction <add>, %7, %cst_9 [1] : vector<2x8xf32> to vector<2xf32>
    %9 = vector.shape_cast %8 : vector<2xf32> to vector<2x1xf32>
    %10 = arith.mulf %7, %7 : vector<2x8xf32>
    %cst_10 = arith.constant dense<0.000000e+00> : vector<2xf32>
    %11 = vector.multi_reduction <add>, %10, %cst_10 [1] : vector<2x8xf32> to vector<2xf32>
    %12 = vector.shape_cast %11 : vector<2xf32> to vector<2x1xf32>
    %13 = vector.broadcast %9 : vector<2x1xf32> to vector<2x32xf32>
    %14 = arith.mulf %13, %1 : vector<2x32xf32>
    %cst_11 = arith.constant dense<0.000000e+00> : vector<32xf32>
    %15 = vector.multi_reduction <add>, %14, %cst_11 [0] : vector<2x32xf32> to vector<32xf32>
    %16 = vector.shape_cast %15 : vector<32xf32> to vector<1x32xf32>
    %cst_12 = arith.constant 6.250000e-02 : f32
    %17 = vector.broadcast %cst_12 : f32 to vector<1x32xf32>
    %18 = arith.mulf %16, %17 : vector<1x32xf32>
    %19 = arith.mulf %1, %1 : vector<2x32xf32>
    %20 = vector.broadcast %12 : vector<2x1xf32> to vector<2x32xf32>
    %21 = arith.mulf %20, %19 : vector<2x32xf32>
    %cst_13 = arith.constant dense<0.000000e+00> : vector<32xf32>
    %22 = vector.multi_reduction <add>, %21, %cst_13 [0] : vector<2x32xf32> to vector<32xf32>
    %23 = vector.shape_cast %22 : vector<32xf32> to vector<1x32xf32>
    %cst_14 = arith.constant 6.250000e-02 : f32
    %24 = vector.broadcast %cst_14 : f32 to vector<1x32xf32>
    %25 = arith.mulf %23, %24 : vector<1x32xf32>
    %26 = arith.mulf %18, %18 : vector<1x32xf32>
    %27 = arith.subf %25, %26 : vector<1x32xf32>
    %cst_15 = arith.constant 0.000000e+00 : f32
    %28 = vector.broadcast %cst_15 : f32 to vector<1x32xf32>
    %29 = arith.maximumf %27, %28 : vector<1x32xf32>
    %c1 = arith.constant 1 : index
    %c0_16 = arith.constant 0 : index
    %30 = vector.load %arg8[%c1, %c0_16] : memref<8x128xf32, #tpu.memory_space<vmem>>, vector<1x32xf32>
    %c2 = arith.constant 2 : index
    %c0_17 = arith.constant 0 : index
    %31 = vector.load %arg8[%c2, %c0_17] : memref<8x128xf32, #tpu.memory_space<vmem>>, vector<1x32xf32>
    %cst_18 = arith.constant 9.99999974E-6 : f32
    %32 = vector.broadcast %cst_18 : f32 to vector<1x32xf32>
    %33 = arith.addf %29, %32 : vector<1x32xf32>
    %34 = math.rsqrt %33 : vector<1x32xf32>
    %35 = arith.mulf %30, %34 : vector<1x32xf32>
    %36 = arith.mulf %18, %35 : vector<1x32xf32>
    %37 = arith.subf %31, %36 : vector<1x32xf32>
    %38 = vector.broadcast %35 : vector<1x32xf32> to vector<2x32xf32>
    %39 = arith.mulf %1, %38 : vector<2x32xf32>
    %c0_19 = arith.constant 0 : index
    %c0_20 = arith.constant 0 : index
    %40 = vector.load %arg4[%c0_19, %c0_20] : memref<32x32xf32, #tpu.memory_space<vmem>>, vector<32x32xf32>
    %cst_21 = arith.constant dense<0.000000e+00> : vector<1x32xf32>
    %41 = tpu.matmul %37, %40, %cst_21 {dimension_numbers = #tpu.dot_dimension_numbers<[1], [0], [0], [1], [0, 0, 1, 1], [], []>} : vector<1x32xf32>, vector<32x32xf32>, vector<1x32xf32> -> vector<1x32xf32>
    %c3 = arith.constant 3 : index
    %c0_22 = arith.constant 0 : index
    %42 = vector.load %arg8[%c3, %c0_22] : memref<8x128xf32, #tpu.memory_space<vmem>>, vector<1x32xf32>
    %43 = arith.addf %41, %42 : vector<1x32xf32>
    %44 = vector.shape_cast %7 : vector<2x8xf32> to vector<2x8x1xf32>
    %45 = vector.shape_cast %39 : vector<2x32xf32> to vector<2x1x32xf32>
    %46 = vector.broadcast %44 : vector<2x8x1xf32> to vector<2x8x32xf32>
    %47 = vector.broadcast %45 : vector<2x1x32xf32> to vector<2x8x32xf32>
    %48 = arith.mulf %46, %47 : vector<2x8x32xf32>
    %49 = vector.shape_cast %48 : vector<2x8x32xf32> to vector<16x32xf32>
    %c0_23 = arith.constant 0 : index
    %c0_24 = arith.constant 0 : index
    %50 = vector.load %arg4[%c0_23, %c0_24] : memref<32x32xf32, #tpu.memory_space<vmem>>, vector<32x32xf32>
    %cst_25 = arith.constant dense<0.000000e+00> : vector<16x32xf32>
    %51 = tpu.matmul %49, %50, %cst_25 {dimension_numbers = #tpu.dot_dimension_numbers<[1], [0], [0], [1], [0, 0, 1, 1], [], []>} : vector<16x32xf32>, vector<32x32xf32>, vector<16x32xf32> -> vector<16x32xf32>
    %52 = vector.broadcast %43 : vector<1x32xf32> to vector<16x32xf32>
    %53 = arith.addf %51, %52 : vector<16x32xf32>
    %cst_26 = arith.constant 0.000000e+00 : f32
    %54 = vector.broadcast %cst_26 : f32 to vector<16x32xf32>
    %55 = arith.maximumf %53, %54 : vector<16x32xf32>
    %c0_27 = arith.constant 0 : index
    %c0_28 = arith.constant 0 : index
    %56 = vector.load %arg5[%c0_27, %c0_28] : memref<32x32xf32, #tpu.memory_space<vmem>>, vector<32x32xf32>
    %cst_29 = arith.constant dense<0.000000e+00> : vector<16x32xf32>
    %57 = tpu.matmul %55, %56, %cst_29 {dimension_numbers = #tpu.dot_dimension_numbers<[1], [0], [0], [1], [0, 0, 1, 1], [], []>} : vector<16x32xf32>, vector<32x32xf32>, vector<16x32xf32> -> vector<16x32xf32>
    %c4 = arith.constant 4 : index
    %c0_30 = arith.constant 0 : index
    %58 = vector.load %arg8[%c4, %c0_30] : memref<8x128xf32, #tpu.memory_space<vmem>>, vector<1x32xf32>
    %59 = vector.broadcast %58 : vector<1x32xf32> to vector<16x32xf32>
    %60 = arith.addf %57, %59 : vector<16x32xf32>
    %cst_31 = arith.constant 0.000000e+00 : f32
    %61 = vector.broadcast %cst_31 : f32 to vector<16x32xf32>
    %62 = arith.maximumf %60, %61 : vector<16x32xf32>
    %c0_32 = arith.constant 0 : index
    %c0_33 = arith.constant 0 : index
    %63 = vector.load %arg6[%c0_32, %c0_33] : memref<32x32xf32, #tpu.memory_space<vmem>>, vector<32x32xf32>
    %cst_34 = arith.constant dense<0.000000e+00> : vector<16x32xf32>
    %64 = tpu.matmul %62, %63, %cst_34 {dimension_numbers = #tpu.dot_dimension_numbers<[1], [0], [0], [1], [0, 0, 1, 1], [], []>} : vector<16x32xf32>, vector<32x32xf32>, vector<16x32xf32> -> vector<16x32xf32>
    %c5 = arith.constant 5 : index
    %c0_35 = arith.constant 0 : index
    %65 = vector.load %arg8[%c5, %c0_35] : memref<8x128xf32, #tpu.memory_space<vmem>>, vector<1x32xf32>
    %66 = vector.broadcast %65 : vector<1x32xf32> to vector<16x32xf32>
    %67 = arith.addf %64, %66 : vector<16x32xf32>
    %cst_36 = arith.constant 0.000000e+00 : f32
    %68 = vector.broadcast %cst_36 : f32 to vector<16x32xf32>
    %69 = arith.maximumf %67, %68 : vector<16x32xf32>
    %70 = vector.shape_cast %69 : vector<16x32xf32> to vector<2x8x32xf32>
    %cst_37 = arith.constant 0.000000e+00 : f32
    %71 = vector.broadcast %cst_37 : f32 to vector<2x128xf32>
    %72 = vector.extract_strided_slice %70 {offsets = [0, 0, 0], sizes = [2, 1, 32], strides = [1, 1, 1]} : vector<2x8x32xf32> to vector<2x1x32xf32>
    %73 = vector.shape_cast %72 : vector<2x1x32xf32> to vector<2x32xf32>
    %c0_38 = arith.constant 0 : index
    %c0_39 = arith.constant 0 : index
    %74 = vector.load %arg7[%c0_38, %c0_39] : memref<256x128xf32, #tpu.memory_space<vmem>>, vector<32x128xf32>
    %cst_40 = arith.constant dense<0.000000e+00> : vector<2x128xf32>
    %75 = tpu.matmul %73, %74, %cst_40 {dimension_numbers = #tpu.dot_dimension_numbers<[1], [0], [0], [1], [0, 0, 1, 1], [], []>} : vector<2x32xf32>, vector<32x128xf32>, vector<2x128xf32> -> vector<2x128xf32>
    %76 = arith.addf %71, %75 : vector<2x128xf32>
    %77 = vector.extract_strided_slice %70 {offsets = [0, 1, 0], sizes = [2, 1, 32], strides = [1, 1, 1]} : vector<2x8x32xf32> to vector<2x1x32xf32>
    %78 = vector.shape_cast %77 : vector<2x1x32xf32> to vector<2x32xf32>
    %c32 = arith.constant 32 : index
    %c0_41 = arith.constant 0 : index
    %79 = vector.load %arg7[%c32, %c0_41] : memref<256x128xf32, #tpu.memory_space<vmem>>, vector<32x128xf32>
    %cst_42 = arith.constant dense<0.000000e+00> : vector<2x128xf32>
    %80 = tpu.matmul %78, %79, %cst_42 {dimension_numbers = #tpu.dot_dimension_numbers<[1], [0], [0], [1], [0, 0, 1, 1], [], []>} : vector<2x32xf32>, vector<32x128xf32>, vector<2x128xf32> -> vector<2x128xf32>
    %81 = arith.addf %76, %80 : vector<2x128xf32>
    %82 = vector.extract_strided_slice %70 {offsets = [0, 2, 0], sizes = [2, 1, 32], strides = [1, 1, 1]} : vector<2x8x32xf32> to vector<2x1x32xf32>
    %83 = vector.shape_cast %82 : vector<2x1x32xf32> to vector<2x32xf32>
    %c64 = arith.constant 64 : index
    %c0_43 = arith.constant 0 : index
    %84 = vector.load %arg7[%c64, %c0_43] : memref<256x128xf32, #tpu.memory_space<vmem>>, vector<32x128xf32>
    %cst_44 = arith.constant dense<0.000000e+00> : vector<2x128xf32>
    %85 = tpu.matmul %83, %84, %cst_44 {dimension_numbers = #tpu.dot_dimension_numbers<[1], [0], [0], [1], [0, 0, 1, 1], [], []>} : vector<2x32xf32>, vector<32x128xf32>, vector<2x128xf32> -> vector<2x128xf32>
    %86 = arith.addf %81, %85 : vector<2x128xf32>
    %87 = vector.extract_strided_slice %70 {offsets = [0, 3, 0], sizes = [2, 1, 32], strides = [1, 1, 1]} : vector<2x8x32xf32> to vector<2x1x32xf32>
    %88 = vector.shape_cast %87 : vector<2x1x32xf32> to vector<2x32xf32>
    %c96 = arith.constant 96 : index
    %c0_45 = arith.constant 0 : index
    %89 = vector.load %arg7[%c96, %c0_45] : memref<256x128xf32, #tpu.memory_space<vmem>>, vector<32x128xf32>
    %cst_46 = arith.constant dense<0.000000e+00> : vector<2x128xf32>
    %90 = tpu.matmul %88, %89, %cst_46 {dimension_numbers = #tpu.dot_dimension_numbers<[1], [0], [0], [1], [0, 0, 1, 1], [], []>} : vector<2x32xf32>, vector<32x128xf32>, vector<2x128xf32> -> vector<2x128xf32>
    %91 = arith.addf %86, %90 : vector<2x128xf32>
    %92 = vector.extract_strided_slice %70 {offsets = [0, 4, 0], sizes = [2, 1, 32], strides = [1, 1, 1]} : vector<2x8x32xf32> to vector<2x1x32xf32>
    %93 = vector.shape_cast %92 : vector<2x1x32xf32> to vector<2x32xf32>
    %c128 = arith.constant 128 : index
    %c0_47 = arith.constant 0 : index
    %94 = vector.load %arg7[%c128, %c0_47] : memref<256x128xf32, #tpu.memory_space<vmem>>, vector<32x128xf32>
    %cst_48 = arith.constant dense<0.000000e+00> : vector<2x128xf32>
    %95 = tpu.matmul %93, %94, %cst_48 {dimension_numbers = #tpu.dot_dimension_numbers<[1], [0], [0], [1], [0, 0, 1, 1], [], []>} : vector<2x32xf32>, vector<32x128xf32>, vector<2x128xf32> -> vector<2x128xf32>
    %96 = arith.addf %91, %95 : vector<2x128xf32>
    %97 = vector.extract_strided_slice %70 {offsets = [0, 5, 0], sizes = [2, 1, 32], strides = [1, 1, 1]} : vector<2x8x32xf32> to vector<2x1x32xf32>
    %98 = vector.shape_cast %97 : vector<2x1x32xf32> to vector<2x32xf32>
    %c160 = arith.constant 160 : index
    %c0_49 = arith.constant 0 : index
    %99 = vector.load %arg7[%c160, %c0_49] : memref<256x128xf32, #tpu.memory_space<vmem>>, vector<32x128xf32>
    %cst_50 = arith.constant dense<0.000000e+00> : vector<2x128xf32>
    %100 = tpu.matmul %98, %99, %cst_50 {dimension_numbers = #tpu.dot_dimension_numbers<[1], [0], [0], [1], [0, 0, 1, 1], [], []>} : vector<2x32xf32>, vector<32x128xf32>, vector<2x128xf32> -> vector<2x128xf32>
    %101 = arith.addf %96, %100 : vector<2x128xf32>
    %102 = vector.extract_strided_slice %70 {offsets = [0, 6, 0], sizes = [2, 1, 32], strides = [1, 1, 1]} : vector<2x8x32xf32> to vector<2x1x32xf32>
    %103 = vector.shape_cast %102 : vector<2x1x32xf32> to vector<2x32xf32>
    %c192 = arith.constant 192 : index
    %c0_51 = arith.constant 0 : index
    %104 = vector.load %arg7[%c192, %c0_51] : memref<256x128xf32, #tpu.memory_space<vmem>>, vector<32x128xf32>
    %cst_52 = arith.constant dense<0.000000e+00> : vector<2x128xf32>
    %105 = tpu.matmul %103, %104, %cst_52 {dimension_numbers = #tpu.dot_dimension_numbers<[1], [0], [0], [1], [0, 0, 1, 1], [], []>} : vector<2x32xf32>, vector<32x128xf32>, vector<2x128xf32> -> vector<2x128xf32>
    %106 = arith.addf %101, %105 : vector<2x128xf32>
    %107 = vector.extract_strided_slice %70 {offsets = [0, 7, 0], sizes = [2, 1, 32], strides = [1, 1, 1]} : vector<2x8x32xf32> to vector<2x1x32xf32>
    %108 = vector.shape_cast %107 : vector<2x1x32xf32> to vector<2x32xf32>
    %c224 = arith.constant 224 : index
    %c0_53 = arith.constant 0 : index
    %109 = vector.load %arg7[%c224, %c0_53] : memref<256x128xf32, #tpu.memory_space<vmem>>, vector<32x128xf32>
    %cst_54 = arith.constant dense<0.000000e+00> : vector<2x128xf32>
    %110 = tpu.matmul %108, %109, %cst_54 {dimension_numbers = #tpu.dot_dimension_numbers<[1], [0], [0], [1], [0, 0, 1, 1], [], []>} : vector<2x32xf32>, vector<32x128xf32>, vector<2x128xf32> -> vector<2x128xf32>
    %111 = arith.addf %106, %110 : vector<2x128xf32>
    %c6 = arith.constant 6 : index
    %c0_55 = arith.constant 0 : index
    %112 = vector.load %arg8[%c6, %c0_55] : memref<8x128xf32, #tpu.memory_space<vmem>>, vector<1x128xf32>
    %113 = vector.broadcast %112 : vector<1x128xf32> to vector<2x128xf32>
    %114 = arith.addf %111, %113 : vector<2x128xf32>
    %c0_56 = arith.constant 0 : index
    %c0_57 = arith.constant 0 : index
    %115 = vector.load %arg9[%c0_56, %c0_57] : memref<2x128xf32, #tpu.memory_space<vmem>>, vector<2x128xf32>
    tpu.vector_store %arg9[%c0_56, %c0_57], %114 {strides = array<i32>} : memref<2x128xf32, #tpu.memory_space<vmem>>, vector<2x128xf32>,
    return
  }
  func.func @transform_0(%arg0: i32) -> (i32, i32, i32) {
    %c0_i32 = arith.constant 0 : i32
    %c0_i32_0 = arith.constant 0 : i32
    %c0_i32_1 = arith.constant 0 : i32
    %c0_i32_2 = arith.constant 0 : i32
    return %c0_i32, %c0_i32_0, %c0_i32_1 : i32, i32, i32
  }
  func.func @transform_1(%arg0: i32) -> (i32, i32) {
    %c0_i32 = arith.constant 0 : i32
    %c0_i32_0 = arith.constant 0 : i32
    %c0_i32_1 = arith.constant 0 : i32
    return %c0_i32, %c0_i32_0 : i32, i32
  }
  func.func @transform_2(%arg0: i32) -> (i32, i32) {
    %c0_i32 = arith.constant 0 : i32
    %c0_i32_0 = arith.constant 0 : i32
    %c0_i32_1 = arith.constant 0 : i32
    return %c0_i32, %c0_i32_0 : i32, i32
  }
  func.func @transform_3(%arg0: i32) -> (i32, i32) {
    %c0_i32 = arith.constant 0 : i32
    %c0_i32_0 = arith.constant 0 : i32
    %c0_i32_1 = arith.constant 0 : i32
    return %c0_i32, %c0_i32_0 : i32, i32
  }
  func.func @transform_4(%arg0: i32) -> (i32, i32) {
    %c0_i32 = arith.constant 0 : i32
    %c0_i32_0 = arith.constant 0 : i32
    %c0_i32_1 = arith.constant 0 : i32
    return %c0_i32, %c0_i32_0 : i32, i32
  }
  func.func @transform_5(%arg0: i32) -> (i32, i32) {
    %c0_i32 = arith.constant 0 : i32
    %c0_i32_0 = arith.constant 0 : i32
    %c0_i32_1 = arith.constant 0 : i32
    return %c0_i32, %c0_i32_0 : i32, i32
  }
  func.func @transform_6(%arg0: i32) -> (i32, i32) {
    %c0_i32 = arith.constant 0 : i32
    %c0_i32_0 = arith.constant 0 : i32
    %c0_i32_1 = arith.constant 0 : i32
    return %c0_i32, %c0_i32_0 : i32, i32
  }
  func.func @transform_7(%arg0: i32) -> (i32, i32) {
    %c0_i32 = arith.constant 0 : i32
    %c0_i32_0 = arith.constant 0 : i32
    %c0_i32_1 = arith.constant 0 : i32
    return %c0_i32, %c0_i32_0 : i32, i32
  }
  func.func @transform_8(%arg0: i32) -> (i32, i32) {
    %c0_i32 = arith.constant 0 : i32
    %c0_i32_0 = arith.constant 0 : i32
    %c0_i32_1 = arith.constant 0 : i32
    return %c0_i32, %c0_i32_0 : i32, i32
  }
}

</mosaic_0001>

<llo_original>
// kernel: tpu_custom_call.1
$region0: #{tpu_custom_call.1}
  #allocation0 [shape = 'u32[]', space=smem, size = 0x4, offset = 0x4, fixed_abs, tag = 'smem constant byte address 0x4 - core index']
  #allocation1 [shape = 'u32[144,128]{1,0:T(1,128)}', space=vmem, size = 0x12000, scoped, tag = 'internal scratch']
  %s0 = inlined_call_operand.hbm [shape: f32[2,8,32], index: 0, kind: input, shape index: {}]
  %s1 = inlined_call_operand.hbm [shape: f32[2,64], index: 1, kind: input, shape index: {}]
  %s2 = inlined_call_operand.vmem [shape: f32[64,8], index: 2, kind: input, shape index: {}]
  %s3 = inlined_call_operand.vmem [shape: f32[32,32], index: 3, kind: input, shape index: {}]
  %s4 = inlined_call_operand.vmem [shape: f32[32,32], index: 4, kind: input, shape index: {}]
  %s5 = inlined_call_operand.hbm [shape: f32[32,32], index: 5, kind: input, shape index: {}]
  %s6 = inlined_call_operand.hbm [shape: f32[256,128], index: 6, kind: input, shape index: {}]
  %s7 = inlined_call_operand.vmem [shape: f32[8,128], index: 7, kind: input, shape index: {}]
  %s8 = inlined_call_operand.hbm [shape: f32[2,128], index: 8, kind: output, shape index: {}]
  %s9 = sld [smem:[#allocation0]]
  $region58: #{tpu_custom_call.1} parent=0
    _
  %s11 = ssub.s32 1, %s9
  %s12 = scalar_select 0, %s11, %s9
  $region1: #{tpu_custom_call.1} parent=0
    #allocation2 [shape = 'u8[8192]{0}', space=vmem, size = 0x2000, scoped, tag = 'input window, operand 0, single buffered']
    #allocation3 [shape = 's32[1]{0}', space=sflag, size = 0x4, scoped, tag = 'scoped memory for tpu_custom_call.1']
    #allocation4 [shape = 's32[1]{0}', space=sflag, size = 0x4, scoped, tag = 'scoped memory for tpu_custom_call.1']
    #allocation5 [shape = 'u8[1024]{0}', space=vmem, size = 0x400, scoped, tag = 'input window, operand 1, single buffered']
    #allocation6 [shape = 's32[1]{0}', space=sflag, size = 0x4, scoped, tag = 'scoped memory for tpu_custom_call.1']
    #allocation7 [shape = 'u8[16384]{0}', space=vmem, size = 0x4000, scoped, tag = 'input window, operand 5, single buffered']
    #allocation8 [shape = 'u8[131072]{0}', space=vmem, size = 0x20000, scoped, tag = 'input window, operand 6, single buffered']
    #allocation9 [shape = 's32[1]{0}', space=sflag, size = 0x4, scoped, tag = 'scoped memory for tpu_custom_call.1']
    #allocation10 [shape = 'u8[1024]{0}', space=vmem, size = 0x400, scoped, tag = 'output window, operand 0, single buffered']
    %13 = vsyncpa [#allocation3], 0
    %14 = vsyncpa [#allocation6], 0
    %15 = vsyncpa [#allocation9], 0
    %16 = vsyncpa [#allocation4], 0
    // Predicated region
    $region2: #{tpu_custom_call.1} parent=1 // pred_check
      _
    $region3: #{tpu_custom_call.1} parent=1 // pred_check_branch
      %18 = sbr.rel (0) target = $region5
    $region4: #{tpu_custom_call.1} parent=1 // pred_region
      %s20 = ssub.s32 256, 256
      %21 = vsyncadd [#allocation3], %s20
      %s22 = sshll.u32 [#allocation2], 4
      %s23 = int_to_ptr.vmem [resolvable:$true] %s22
      %28 = dma.hbm_to_vmem [thread:$0]  %s0, 256, %s23, [#allocation3], 128, 128, 8
    $region5: #{tpu_custom_call.1} parent=1 // pred_fallthru
      _
    // Predicated region
    $region6: #{tpu_custom_call.1} parent=1 // pred_check
      _
    $region7: #{tpu_custom_call.1} parent=1 // pred_check_branch
      %30 = sbr.rel (0) target = $region9
    $region8: #{tpu_custom_call.1} parent=1 // pred_region
      %s32 = ssub.s32 32, 32
      %33 = vsyncadd [#allocation6], %s32
      %s35 = sshll.u32 [#allocation5], 4
      %s36 = int_to_ptr.vmem [resolvable:$true] %s35
      %38 = dma.hbm_to_vmem [thread:$0]  %s1, 32, %s36, [#allocation6]
    $region9: #{tpu_custom_call.1} parent=1 // pred_fallthru
      _
    // Predicated region
    $region10: #{tpu_custom_call.1} parent=1 // pred_check
      _
    $region11: #{tpu_custom_call.1} parent=1 // pred_check_branch
      %40 = sbr.rel (0) target = $region13
    $region12: #{tpu_custom_call.1} parent=1 // pred_region
      _
    $region13: #{tpu_custom_call.1} parent=1 // pred_fallthru
      _
    // Predicated region
    $region14: #{tpu_custom_call.1} parent=1 // pred_check
      _
    $region15: #{tpu_custom_call.1} parent=1 // pred_check_branch
      %42 = sbr.rel (0) target = $region17
    $region16: #{tpu_custom_call.1} parent=1 // pred_region
      _
    $region17: #{tpu_custom_call.1} parent=1 // pred_fallthru
      _
    // Predicated region
    $region18: #{tpu_custom_call.1} parent=1 // pred_check
      _
    $region19: #{tpu_custom_call.1} parent=1 // pred_check_branch
      %44 = sbr.rel (0) target = $region21
    $region20: #{tpu_custom_call.1} parent=1 // pred_region
      _
    $region21: #{tpu_custom_call.1} parent=1 // pred_fallthru
      _
    // Predicated region
    $region22: #{tpu_custom_call.1} parent=1 // pred_check
      _
    $region23: #{tpu_custom_call.1} parent=1 // pred_check_branch
      %46 = sbr.rel (0) target = $region25
    $region24: #{tpu_custom_call.1} parent=1 // pred_region
      %s48 = ssub.s32 512, 512
      %49 = vsyncadd [#allocation6], %s48
      %s50 = sshll.u32 [#allocation7], 4
      %s51 = int_to_ptr.vmem [resolvable:$true] %s50
      %56 = dma.hbm_to_vmem [thread:$0]  %s5, 512, %s51, [#allocation6], 128, 128, 8
    $region25: #{tpu_custom_call.1} parent=1 // pred_fallthru
      _
    // Predicated region
    $region26: #{tpu_custom_call.1} parent=1 // pred_check
      _
    $region27: #{tpu_custom_call.1} parent=1 // pred_check_branch
      %58 = sbr.rel (0) target = $region29
    $region28: #{tpu_custom_call.1} parent=1 // pred_region
      %s60 = ssub.s32 4096, 4096
      %61 = vsyncadd [#allocation9], %s60
      %s62 = sshll.u32 [#allocation8], 4
      %s63 = int_to_ptr.vmem [resolvable:$true] %s62
      %68 = dma.hbm_to_vmem [thread:$0]  %s6, 4096, %s63, [#allocation9], 128, 128, 8
    $region29: #{tpu_custom_call.1} parent=1 // pred_fallthru
      _
    // Predicated region
    $region30: #{tpu_custom_call.1} parent=1 // pred_check
      _
    $region31: #{tpu_custom_call.1} parent=1 // pred_check_branch
      %70 = sbr.rel (0) target = $region33
    $region32: #{tpu_custom_call.1} parent=1 // pred_region
      _
    $region33: #{tpu_custom_call.1} parent=1 // pred_fallthru
      _
    // Predicated region
    $region34: #{tpu_custom_call.1} parent=1 // pred_check
      _
    $region35: #{tpu_custom_call.1} parent=1 // pred_check_branch
      %72 = sbr.rel (0) target = $region37
    $region36: #{tpu_custom_call.1} parent=1 // pred_region
      %73 = dma.done [#allocation3], 256
    $region37: #{tpu_custom_call.1} parent=1 // pred_fallthru
      _
    // Predicated region
    $region38: #{tpu_custom_call.1} parent=1 // pred_check
      _
    $region39: #{tpu_custom_call.1} parent=1 // pred_check_branch
      %75 = sbr.rel (0) target = $region41
    $region40: #{tpu_custom_call.1} parent=1 // pred_region
      %76 = dma.done [#allocation6], 32
    $region41: #{tpu_custom_call.1} parent=1 // pred_fallthru
      _
    // Predicated region
    $region42: #{tpu_custom_call.1} parent=1 // pred_check
      _
    $region43: #{tpu_custom_call.1} parent=1 // pred_check_branch
      %78 = sbr.rel (0) target = $region45
    $region44: #{tpu_custom_call.1} parent=1 // pred_region
      %79 = dma.done [#allocation6], 512
    $region45: #{tpu_custom_call.1} parent=1 // pred_fallthru
      _
    // Predicated region
    $region46: #{tpu_custom_call.1} parent=1 // pred_check
      _
    $region47: #{tpu_custom_call.1} parent=1 // pred_check_branch
      %81 = sbr.rel (0) target = $region49
    $region48: #{tpu_custom_call.1} parent=1 // pred_region
      %82 = dma.done [#allocation9], 4096
    $region49: #{tpu_custom_call.1} parent=1 // pred_fallthru
      _
    %v83 = vld [vmem:[#allocation2] sm:$0xff]
    %v84 = vld [vmem:[#allocation2 + $0x8] sm:$0xff]
    %vm85 = vcmask 261120
    %v86 = vsel %vm85, %v83, 0.0
    %v87 = vrot.slane %v86, 4
    %v88 = vadd.f32 %v86, %v87
    %v89 = vrot.slane %v88, 2
    %v90 = vadd.f32 %v88, %v89
    %v91 = vrot.slane %v90, 1
    %v92 = vadd.f32 %v90, %v91
    %v93 = vsel %vm85, %v84, 0.0
    %v94 = vrot.slane %v93, 4
    %v95 = vadd.f32 %v93, %v94
    %v96 = vrot.slane %v95, 2
    %v97 = vadd.f32 %v95, %v96
    %v98 = vrot.slane %v97, 1
    %v99 = vadd.f32 %v97, %v98
    %v100 = vld [vmem:[#allocation5] sm:$0x3]
    %v101 = vld [vmem:[%s2] sm:$0xff]
    %v102 = vld [vmem:[%s2 + $0x8] sm:$0xff]
    %v103 = vld [vmem:[%s2 + $0x10] sm:$0xff]
    %v104 = vld [vmem:[%s2 + $0x18] sm:$0xff]
    %v105 = vld [vmem:[%s2 + $0x20] sm:$0xff]
    %v106 = vld [vmem:[%s2 + $0x28] sm:$0xff]
    %v107 = vld [vmem:[%s2 + $0x30] sm:$0xff]
    %v108 = vld [vmem:[%s2 + $0x38] sm:$0xff]
    %v109 = vld [vmem:[%s7] sm:$0x1]
    %v110 = vlaneseq
    %v111 = vshrl.u32 %v110, 7
    %v112 = vsub.s32 0, %v111
    %v113 = vrot.slane %v109, %v112
    %vm114 = vcmask 523264
    %v116 = vsel %vm114, %v100, 0
    %118 = vmatprep.subr.mxu0 0.0
    %119 = vmatpush1.msra.mxu0 0.0
    %120 = vmatprep.subr.mxu0 0.0
    %121 = vmatpush1.msra.mxu0 0.0
    %122 = vmatprep.subr.mxu0 0.0
    %123 = vmatpush1.msra.mxu0 0.0
    %124 = vmatprep.subr.mxu0 0.0
    %125 = vmatpush1.msra.mxu0 0.0
    %126 = vmatprep.subr.mxu0 0.0
    %127 = vmatpush1.msra.mxu0 0.0
    %128 = vmatprep.subr.mxu0 0.0
    %129 = vmatpush1.msra.mxu0 0.0
    %130 = vmatprep.subr.mxu0 0.0
    %131 = vmatpush1.msra.mxu0 0.0
    %132 = vmatprep.subr.mxu0 0.0
    %133 = vmatpush1.msra.mxu0 0.0
    %134 = vmatprep.subr.mxu0 0.0
    %135 = vmatpush1.msra.mxu0 %v108
    %136 = vmatprep.subr.mxu0 0.0
    %137 = vmatpush1.msra.mxu0 %v107
    %138 = vmatprep.subr.mxu0 0.0
    %139 = vmatpush1.msra.mxu0 %v106
    %140 = vmatprep.subr.mxu0 0.0
    %141 = vmatpush1.msra.mxu0 %v105
    %142 = vmatprep.subr.mxu0 0.0
    %143 = vmatpush1.msra.mxu0 %v104
    %144 = vmatprep.subr.mxu0 0.0
    %145 = vmatpush1.msra.mxu0 %v103
    %146 = vmatprep.subr.mxu0 0.0
    %147 = vmatpush1.msra.mxu0 %v102
    %148 = vmatprep.subr.mxu0 0.0
    %149 = vmatpush1.msra.mxu0 %v101
    %150 = vmatprep.subr.mxu0 0.0
    %151 = vmatpush2.msra.mxu0 0.0
    %152 = vmatprep.subr.mxu0 0.0
    %153 = vmatpush2.msra.mxu0 0.0
    %154 = vmatprep.subr.mxu0 0.0
    %155 = vmatpush2.msra.mxu0 0.0
    %156 = vmatprep.subr.mxu0 0.0
    %157 = vmatpush2.msra.mxu0 0.0
    %158 = vmatprep.subr.mxu0 0.0
    %159 = vmatpush2.msra.mxu0 0.0
    %160 = vmatprep.subr.mxu0 0.0
    %161 = vmatpush2.msra.mxu0 0.0
    %162 = vmatprep.subr.mxu0 0.0
    %163 = vmatpush2.msra.mxu0 0.0
    %164 = vmatprep.subr.mxu0 0.0
    %165 = vmatpush2.msra.mxu0 0.0
    %166 = vmatprep.subr.mxu0 0.0
    %167 = vmatpush2.msra.mxu0 0.0
    %168 = vmatprep.subr.mxu0 0.0
    %169 = vmatpush2.msra.mxu0 0.0
    %170 = vmatprep.subr.mxu0 0.0
    %171 = vmatpush2.msra.mxu0 0.0
    %172 = vmatprep.subr.mxu0 0.0
    %173 = vmatpush2.msra.mxu0 0.0
    %174 = vmatprep.subr.mxu0 0.0
    %175 = vmatpush2.msra.mxu0 0.0
    %176 = vmatprep.subr.mxu0 0.0
    %177 = vmatpush2.msra.mxu0 0.0
    %178 = vmatprep.subr.mxu0 0.0
    %179 = vmatpush2.msra.mxu0 0.0
    %180 = vmatprep.subr.mxu0 0.0
    %181 = vmatpush2.msra.mxu0 0.0
    %182 = vmatprep.mubr.f32.mxu0 0.0
    %183 = vmatmul.mubr.f32.gmra.mxu0 %v116
    %v184 = vpop.f32.mrf.mxu0
    %v185 = vadd.f32 %v113, %v184
    %v186 = vpop.f32.mrf.mxu0
    %187 = vdwg.mxu0
    %vm188 = vcmask 58368
    %v189 = vsel %vm188, %v185, 0.0
    %190 = vadd.xlane.f32.xlu0 %v189
    %v191 = vpop.xlane.xlu0 %190
    %v192 = vmul.f32 %v185, %v185
    %v193 = vsel %vm188, %v192, 0.0
    %194 = vadd.xlane.f32.xlu0 %v193
    %v195 = vpop.xlane.xlu0 %194
    %vm198 = vcmask 1041409
    %v199 = vsel %vm198, %v99, %v92
    %v201 = vmul.f32 %v191, %v199
    %vm202 = vcmask 254976
    %v203 = vsel %vm202, %v201, 0.0
    %v204 = vrot.slane %v203, 4
    %v205 = vadd.f32 %v203, %v204
    %v206 = vrot.slane %v205, 2
    %v207 = vadd.f32 %v205, %v206
    %v208 = vrot.slane %v207, 1
    %v209 = vadd.f32 %v207, %v208
    %v210 = vmul.f32 %v209, 0.0625
    %v211 = vmul.f32 %v92, %v92
    %v212 = vmul.f32 %v99, %v99
    %v215 = vsel %vm198, %v212, %v211
    %v217 = vmul.f32 %v195, %v215
    %v218 = vsel %vm202, %v217, 0.0
    %v219 = vrot.slane %v218, 4
    %v220 = vadd.f32 %v218, %v219
    %v221 = vrot.slane %v220, 2
    %v222 = vadd.f32 %v220, %v221
    %v223 = vrot.slane %v222, 1
    %v224 = vadd.f32 %v222, %v223
    %v225 = vmul.f32 %v224, 0.0625
    %v226 = vmul.f32 %v210, %v210
    %v227 = vsub.f32 %v225, %v226
    %v228 = vmax.f32 %v227, 0.0
    %v229 = vld [vmem:[%s7 + $0x1] sm:$0x1]
    %v230 = vld [vmem:[%s7 + $0x2] sm:$0x1]
    %v231 = vadd.f32 %v228, 1e-05
    %v232 = vrsqrt.pop %v231
    %v233 = vmul.f32 %v229, %v232
    %v234 = vmul.f32 %v210, %v233
    %v235 = vsub.f32 %v230, %v234
    %v236 = vlaneseq
    %v237 = vshrl.u32 %v236, 7
    %v238 = vsub.s32 0, %v237
    %v239 = vrot.slane %v233, %v238
    %v240 = vmul.f32 %v92, %v239
    %v241 = vmul.f32 %v99, %v239
    %v242 = vld [vmem:[%s3] sm:$0xff]
    %v243 = vld [vmem:[%s3 + $0x8] sm:$0xff]
    %v244 = vld [vmem:[%s3 + $0x10] sm:$0xff]
    %v245 = vld [vmem:[%s3 + $0x18] sm:$0xff]
    %v246 = vld [vmem:[%s7 + $0x3] sm:$0x1]
    %v248 = vsel %vm85, %v235, 0
    %250 = vmatprep.subr.mxu0 0.0
    %251 = vmatpush1.msra.mxu0 0.0
    %252 = vmatprep.subr.mxu0 0.0
    %253 = vmatpush1.msra.mxu0 0.0
    %254 = vmatprep.subr.mxu0 0.0
    %255 = vmatpush1.msra.mxu0 0.0
    %256 = vmatprep.subr.mxu0 0.0
    %257 = vmatpush1.msra.mxu0 0.0
    %258 = vmatprep.subr.mxu0 0.0
    %259 = vmatpush1.msra.mxu0 0.0
    %260 = vmatprep.subr.mxu0 0.0
    %261 = vmatpush1.msra.mxu0 0.0
    %262 = vmatprep.subr.mxu0 0.0
    %263 = vmatpush1.msra.mxu0 0.0
    %264 = vmatprep.subr.mxu0 0.0
    %265 = vmatpush1.msra.mxu0 0.0
    %266 = vmatprep.subr.mxu0 0.0
    %267 = vmatpush1.msra.mxu0 0.0
    %268 = vmatprep.subr.mxu0 0.0
    %269 = vmatpush1.msra.mxu0 0.0
    %270 = vmatprep.subr.mxu0 0.0
    %271 = vmatpush1.msra.mxu0 0.0
    %272 = vmatprep.subr.mxu0 0.0
    %273 = vmatpush1.msra.mxu0 0.0
    %274 = vmatprep.subr.mxu0 0.0
    %275 = vmatpush1.msra.mxu0 %v245
    %276 = vmatprep.subr.mxu0 0.0
    %277 = vmatpush1.msra.mxu0 %v244
    %278 = vmatprep.subr.mxu0 0.0
    %279 = vmatpush1.msra.mxu0 %v243
    %280 = vmatprep.subr.mxu0 0.0
    %281 = vmatpush1.msra.mxu0 %v242
    %282 = vmatprep.subr.mxu0 0.0
    %283 = vmatpush2.msra.mxu0 0.0
    %284 = vmatprep.subr.mxu0 0.0
    %285 = vmatpush2.msra.mxu0 0.0
    %286 = vmatprep.subr.mxu0 0.0
    %287 = vmatpush2.msra.mxu0 0.0
    %288 = vmatprep.subr.mxu0 0.0
    %289 = vmatpush2.msra.mxu0 0.0
    %290 = vmatprep.subr.mxu0 0.0
    %291 = vmatpush2.msra.mxu0 0.0
    %292 = vmatprep.subr.mxu0 0.0
    %293 = vmatpush2.msra.mxu0 0.0
    %294 = vmatprep.subr.mxu0 0.0
    %295 = vmatpush2.msra.mxu0 0.0
    %296 = vmatprep.subr.mxu0 0.0
    %297 = vmatpush2.msra.mxu0 0.0
    %298 = vmatprep.subr.mxu0 0.0
    %299 = vmatpush2.msra.mxu0 0.0
    %300 = vmatprep.subr.mxu0 0.0
    %301 = vmatpush2.msra.mxu0 0.0
    %302 = vmatprep.subr.mxu0 0.0
    %303 = vmatpush2.msra.mxu0 0.0
    %304 = vmatprep.subr.mxu0 0.0
    %305 = vmatpush2.msra.mxu0 0.0
    %306 = vmatprep.subr.mxu0 0.0
    %307 = vmatpush2.msra.mxu0 0.0
    %308 = vmatprep.subr.mxu0 0.0
    %309 = vmatpush2.msra.mxu0 0.0
    %310 = vmatprep.subr.mxu0 0.0
    %311 = vmatpush2.msra.mxu0 0.0
    %312 = vmatprep.subr.mxu0 0.0
    %313 = vmatpush2.msra.mxu0 0.0
    %314 = vmatprep.mubr.f32.mxu0 0.0
    %315 = vmatmul.mubr.f32.gmra.mxu0 %v248
    %v316 = vpop.f32.mrf.mxu0
    %v317 = vadd.f32 %v246, %v316
    %v318 = vpop.f32.mrf.mxu0
    %319 = vdwg.mxu0
    %v320 = vlaneseq
    %v321 = vshrl.u32 %v320, 7
    %v322 = vsub.s32 0, %v321
    %v323 = vrot.slane %v185, %v322
    %325 = vbcast.lane.b32.xlu0 %v323, 256
    %v326 = vpop.permute.xlu0 %325
    %v327 = vlaneseq
    %v328 = vshrl.u32 %v327, 7
    %v329 = vsub.s32 1, %v328
    %v330 = vrot.slane %v185, %v329
    %332 = vbcast.lane.b32.xlu0 %v330, 256
    %v333 = vpop.permute.xlu0 %332
    %v334 = vlaneseq
    %v335 = vshrl.u32 %v334, 7
    %v336 = vsub.s32 0, %v335
    %v337 = vrot.slane %v240, %v336
    %v338 = vlaneseq
    %v339 = vshrl.u32 %v338, 7
    %v340 = vsub.s32 0, %v339
    %v341 = vrot.slane %v241, %v340
    %v342 = vmul.f32 %v326, %v337
    %v343 = vmul.f32 %v333, %v341
    %v344 = vlaneseq
    %v345 = vshrl.u32 %v344, 7
    %v346 = vsub.s32 0, %v345
    %v347 = vrot.slane %v317, %v346
    %v349 = vsel %vm85, %v342, 0
    %v352 = vsel %vm85, %v343, 0
    %354 = vmatprep.subr.mxu0 0.0
    %355 = vmatpush1.msra.mxu0 0.0
    %356 = vmatprep.subr.mxu0 0.0
    %357 = vmatpush1.msra.mxu0 0.0
    %358 = vmatprep.subr.mxu0 0.0
    %359 = vmatpush1.msra.mxu0 0.0
    %360 = vmatprep.subr.mxu0 0.0
    %361 = vmatpush1.msra.mxu0 0.0
    %362 = vmatprep.subr.mxu0 0.0
    %363 = vmatpush1.msra.mxu0 0.0
    %364 = vmatprep.subr.mxu0 0.0
    %365 = vmatpush1.msra.mxu0 0.0
    %366 = vmatprep.subr.mxu0 0.0
    %367 = vmatpush1.msra.mxu0 0.0
    %368 = vmatprep.subr.mxu0 0.0
    %369 = vmatpush1.msra.mxu0 0.0
    %370 = vmatprep.subr.mxu0 0.0
    %371 = vmatpush1.msra.mxu0 0.0
    %372 = vmatprep.subr.mxu0 0.0
    %373 = vmatpush1.msra.mxu0 0.0
    %374 = vmatprep.subr.mxu0 0.0
    %375 = vmatpush1.msra.mxu0 0.0
    %376 = vmatprep.subr.mxu0 0.0
    %377 = vmatpush1.msra.mxu0 0.0
    %378 = vmatprep.subr.mxu0 0.0
    %379 = vmatpush1.msra.mxu0 %v245
    %380 = vmatprep.subr.mxu0 0.0
    %381 = vmatpush1.msra.mxu0 %v244
    %382 = vmatprep.subr.mxu0 0.0
    %383 = vmatpush1.msra.mxu0 %v243
    %384 = vmatprep.subr.mxu0 0.0
    %385 = vmatpush1.msra.mxu0 %v242
    %386 = vmatprep.subr.mxu0 0.0
    %387 = vmatpush2.msra.mxu0 0.0
    %388 = vmatprep.subr.mxu0 0.0
    %389 = vmatpush2.msra.mxu0 0.0
    %390 = vmatprep.subr.mxu0 0.0
    %391 = vmatpush2.msra.mxu0 0.0
    %392 = vmatprep.subr.mxu0 0.0
    %393 = vmatpush2.msra.mxu0 0.0
    %394 = vmatprep.subr.mxu0 0.0
    %395 = vmatpush2.msra.mxu0 0.0
    %396 = vmatprep.subr.mxu0 0.0
    %397 = vmatpush2.msra.mxu0 0.0
    %398 = vmatprep.subr.mxu0 0.0
    %399 = vmatpush2.msra.mxu0 0.0
    %400 = vmatprep.subr.mxu0 0.0
    %401 = vmatpush2.msra.mxu0 0.0
    %402 = vmatprep.subr.mxu0 0.0
    %403 = vmatpush2.msra.mxu0 0.0
    %404 = vmatprep.subr.mxu0 0.0
    %405 = vmatpush2.msra.mxu0 0.0
    %406 = vmatprep.subr.mxu0 0.0
    %407 = vmatpush2.msra.mxu0 0.0
    %408 = vmatprep.subr.mxu0 0.0
    %409 = vmatpush2.msra.mxu0 0.0
    %410 = vmatprep.subr.mxu0 0.0
    %411 = vmatpush2.msra.mxu0 0.0
    %412 = vmatprep.subr.mxu0 0.0
    %413 = vmatpush2.msra.mxu0 0.0
    %414 = vmatprep.subr.mxu0 0.0
    %415 = vmatpush2.msra.mxu0 0.0
    %416 = vmatprep.subr.mxu0 0.0
    %417 = vmatpush2.msra.mxu0 0.0
    %418 = vmatprep.mubr.f32.mxu0 0.0
    %419 = vmatmul.mubr.f32.gmra.mxu0 %v349
    %v420 = vpop.f32.mrf.mxu0
    %v421 = vadd.f32 %v347, %v420
    %v422 = vpop.f32.mrf.mxu0
    %423 = vmatprep.mubr.f32.mxu0 0.0
    %424 = vmatmul.mubr.f32.gmra.mxu0 %v352
    %v425 = vpop.f32.mrf.mxu0
    %v426 = vadd.f32 %v347, %v425
    %v427 = vpop.f32.mrf.mxu0
    %428 = vdwg.mxu0
    %v429 = vmax.f32 %v421, 0.0
    %v430 = vmax.f32 %v426, 0.0
    %v431 = vld [vmem:[%s4] sm:$0xff]
    %v432 = vld [vmem:[%s4 + $0x8] sm:$0xff]
    %v433 = vld [vmem:[%s4 + $0x10] sm:$0xff]
    %v434 = vld [vmem:[%s4 + $0x18] sm:$0xff]
    %v435 = vld [vmem:[%s7 + $0x4] sm:$0x1]
    %v436 = vlaneseq
    %v437 = vshrl.u32 %v436, 7
    %v438 = vsub.s32 0, %v437
    %v439 = vrot.slane %v435, %v438
    %v441 = vsel %vm85, %v429, 0
    %v444 = vsel %vm85, %v430, 0
    %446 = vmatprep.subr.mxu0 0.0
    %447 = vmatpush1.msra.mxu0 0.0
    %448 = vmatprep.subr.mxu0 0.0
    %449 = vmatpush1.msra.mxu0 0.0
    %450 = vmatprep.subr.mxu0 0.0
    %451 = vmatpush1.msra.mxu0 0.0
    %452 = vmatprep.subr.mxu0 0.0
    %453 = vmatpush1.msra.mxu0 0.0
    %454 = vmatprep.subr.mxu0 0.0
    %455 = vmatpush1.msra.mxu0 0.0
    %456 = vmatprep.subr.mxu0 0.0
    %457 = vmatpush1.msra.mxu0 0.0
    %458 = vmatprep.subr.mxu0 0.0
    %459 = vmatpush1.msra.mxu0 0.0
    %460 = vmatprep.subr.mxu0 0.0
    %461 = vmatpush1.msra.mxu0 0.0
    %462 = vmatprep.subr.mxu0 0.0
    %463 = vmatpush1.msra.mxu0 0.0
    %464 = vmatprep.subr.mxu0 0.0
    %465 = vmatpush1.msra.mxu0 0.0
    %466 = vmatprep.subr.mxu0 0.0
    %467 = vmatpush1.msra.mxu0 0.0
    %468 = vmatprep.subr.mxu0 0.0
    %469 = vmatpush1.msra.mxu0 0.0
    %470 = vmatprep.subr.mxu0 0.0
    %471 = vmatpush1.msra.mxu0 %v434
    %472 = vmatprep.subr.mxu0 0.0
    %473 = vmatpush1.msra.mxu0 %v433
    %474 = vmatprep.subr.mxu0 0.0
    %475 = vmatpush1.msra.mxu0 %v432
    %476 = vmatprep.subr.mxu0 0.0
    %477 = vmatpush1.msra.mxu0 %v431
    %478 = vmatprep.subr.mxu0 0.0
    %479 = vmatpush2.msra.mxu0 0.0
    %480 = vmatprep.subr.mxu0 0.0
    %481 = vmatpush2.msra.mxu0 0.0
    %482 = vmatprep.subr.mxu0 0.0
    %483 = vmatpush2.msra.mxu0 0.0
    %484 = vmatprep.subr.mxu0 0.0
    %485 = vmatpush2.msra.mxu0 0.0
    %486 = vmatprep.subr.mxu0 0.0
    %487 = vmatpush2.msra.mxu0 0.0
    %488 = vmatprep.subr.mxu0 0.0
    %489 = vmatpush2.msra.mxu0 0.0
    %490 = vmatprep.subr.mxu0 0.0
    %491 = vmatpush2.msra.mxu0 0.0
    %492 = vmatprep.subr.mxu0 0.0
    %493 = vmatpush2.msra.mxu0 0.0
    %494 = vmatprep.subr.mxu0 0.0
    %495 = vmatpush2.msra.mxu0 0.0
    %496 = vmatprep.subr.mxu0 0.0
    %497 = vmatpush2.msra.mxu0 0.0
    %498 = vmatprep.subr.mxu0 0.0
    %499 = vmatpush2.msra.mxu0 0.0
    %500 = vmatprep.subr.mxu0 0.0
    %501 = vmatpush2.msra.mxu0 0.0
    %502 = vmatprep.subr.mxu0 0.0
    %503 = vmatpush2.msra.mxu0 0.0
    %504 = vmatprep.subr.mxu0 0.0
    %505 = vmatpush2.msra.mxu0 0.0
    %506 = vmatprep.subr.mxu0 0.0
    %507 = vmatpush2.msra.mxu0 0.0
    %508 = vmatprep.subr.mxu0 0.0
    %509 = vmatpush2.msra.mxu0 0.0
    %510 = vmatprep.mubr.f32.mxu0 0.0
    %511 = vmatmul.mubr.f32.gmra.mxu0 %v441
    %v512 = vpop.f32.mrf.mxu0
    %v513 = vadd.f32 %v439, %v512
    %v514 = vpop.f32.mrf.mxu0
    %515 = vmatprep.mubr.f32.mxu0 0.0
    %516 = vmatmul.mubr.f32.gmra.mxu0 %v444
    %v517 = vpop.f32.mrf.mxu0
    %v518 = vadd.f32 %v439, %v517
    %v519 = vpop.f32.mrf.mxu0
    %520 = vdwg.mxu0
    %v521 = vmax.f32 %v513, 0.0
    %v522 = vmax.f32 %v518, 0.0
    %v523 = vld [vmem:[#allocation7] sm:$0xff]
    %v524 = vld [vmem:[#allocation7 + $0x8] sm:$0xff]
    %v525 = vld [vmem:[#allocation7 + $0x10] sm:$0xff]
    %v526 = vld [vmem:[#allocation7 + $0x18] sm:$0xff]
    %v527 = vld [vmem:[%s7 + $0x5] sm:$0x1]
    %v528 = vlaneseq
    %v529 = vshrl.u32 %v528, 7
    %v530 = vsub.s32 0, %v529
    %v531 = vrot.slane %v527, %v530
    %v533 = vsel %vm85, %v521, 0
    %v536 = vsel %vm85, %v522, 0
    %538 = vmatprep.subr.mxu0 0.0
    %539 = vmatpush1.msra.mxu0 0.0
    %540 = vmatprep.subr.mxu0 0.0
    %541 = vmatpush1.msra.mxu0 0.0
    %542 = vmatprep.subr.mxu0 0.0
    %543 = vmatpush1.msra.mxu0 0.0
    %544 = vmatprep.subr.mxu0 0.0
    %545 = vmatpush1.msra.mxu0 0.0
    %546 = vmatprep.subr.mxu0 0.0
    %547 = vmatpush1.msra.mxu0 0.0
    %548 = vmatprep.subr.mxu0 0.0
    %549 = vmatpush1.msra.mxu0 0.0
    %550 = vmatprep.subr.mxu0 0.0
    %551 = vmatpush1.msra.mxu0 0.0
    %552 = vmatprep.subr.mxu0 0.0
    %553 = vmatpush1.msra.mxu0 0.0
    %554 = vmatprep.subr.mxu0 0.0
    %555 = vmatpush1.msra.mxu0 0.0
    %556 = vmatprep.subr.mxu0 0.0
    %557 = vmatpush1.msra.mxu0 0.0
    %558 = vmatprep.subr.mxu0 0.0
    %559 = vmatpush1.msra.mxu0 0.0
    %560 = vmatprep.subr.mxu0 0.0
    %561 = vmatpush1.msra.mxu0 0.0
    %562 = vmatprep.subr.mxu0 0.0
    %563 = vmatpush1.msra.mxu0 %v526
    %564 = vmatprep.subr.mxu0 0.0
    %565 = vmatpush1.msra.mxu0 %v525
    %566 = vmatprep.subr.mxu0 0.0
    %567 = vmatpush1.msra.mxu0 %v524
    %568 = vmatprep.subr.mxu0 0.0
    %569 = vmatpush1.msra.mxu0 %v523
    %570 = vmatprep.subr.mxu0 0.0
    %571 = vmatpush2.msra.mxu0 0.0
    %572 = vmatprep.subr.mxu0 0.0
    %573 = vmatpush2.msra.mxu0 0.0
    %574 = vmatprep.subr.mxu0 0.0
    %575 = vmatpush2.msra.mxu0 0.0
    %576 = vmatprep.subr.mxu0 0.0
    %577 = vmatpush2.msra.mxu0 0.0
    %578 = vmatprep.subr.mxu0 0.0
    %579 = vmatpush2.msra.mxu0 0.0
    %580 = vmatprep.subr.mxu0 0.0
    %581 = vmatpush2.msra.mxu0 0.0
    %582 = vmatprep.subr.mxu0 0.0
    %583 = vmatpush2.msra.mxu0 0.0
    %584 = vmatprep.subr.mxu0 0.0
    %585 = vmatpush2.msra.mxu0 0.0
    %586 = vmatprep.subr.mxu0 0.0
    %587 = vmatpush2.msra.mxu0 0.0
    %588 = vmatprep.subr.mxu0 0.0
    %589 = vmatpush2.msra.mxu0 0.0
    %590 = vmatprep.subr.mxu0 0.0
    %591 = vmatpush2.msra.mxu0 0.0
    %592 = vmatprep.subr.mxu0 0.0
    %593 = vmatpush2.msra.mxu0 0.0
    %594 = vmatprep.subr.mxu0 0.0
    %595 = vmatpush2.msra.mxu0 0.0
    %596 = vmatprep.subr.mxu0 0.0
    %597 = vmatpush2.msra.mxu0 0.0
    %598 = vmatprep.subr.mxu0 0.0
    %599 = vmatpush2.msra.mxu0 0.0
    %600 = vmatprep.subr.mxu0 0.0
    %601 = vmatpush2.msra.mxu0 0.0
    %602 = vmatprep.mubr.f32.mxu0 0.0
    %603 = vmatmul.mubr.f32.gmra.mxu0 %v533
    %v604 = vpop.f32.mrf.mxu0
    %v605 = vadd.f32 %v531, %v604
    %v606 = vpop.f32.mrf.mxu0
    %607 = vmatprep.mubr.f32.mxu0 0.0
    %608 = vmatmul.mubr.f32.gmra.mxu0 %v536
    %v609 = vpop.f32.mrf.mxu0
    %v610 = vadd.f32 %v531, %v609
    %v611 = vpop.f32.mrf.mxu0
    %612 = vdwg.mxu0
    %v613 = vmax.f32 %v605, 0.0
    %v614 = vmax.f32 %v610, 0.0
    %v615 = vld [vmem:[#allocation8] sm:$0xff]
    %v616 = vld [vmem:[#allocation8 + $0x8] sm:$0xff]
    %v617 = vld [vmem:[#allocation8 + $0x10] sm:$0xff]
    %v618 = vld [vmem:[#allocation8 + $0x18] sm:$0xff]
    %v619 = vld [vmem:[#allocation8 + $0x20] sm:$0xff]
    %v620 = vld [vmem:[#allocation8 + $0x28] sm:$0xff]
    %v621 = vld [vmem:[#allocation8 + $0x30] sm:$0xff]
    %v622 = vld [vmem:[#allocation8 + $0x38] sm:$0xff]
    %v625 = vrot.slane %v613, 1
    %v626 = vsel %vm198, %v614, %v625
    %v627 = vsel %vm85, %v626, 0
    %629 = vmatprep.subr.mxu0 0.0
    %630 = vmatpush1.msra.mxu0 0.0
    %631 = vmatprep.subr.mxu0 0.0
    %632 = vmatpush1.msra.mxu0 0.0
    %633 = vmatprep.subr.mxu0 0.0
    %634 = vmatpush1.msra.mxu0 0.0
    %635 = vmatprep.subr.mxu0 0.0
    %636 = vmatpush1.msra.mxu0 0.0
    %637 = vmatprep.subr.mxu0 0.0
    %638 = vmatpush1.msra.mxu0 0.0
    %639 = vmatprep.subr.mxu0 0.0
    %640 = vmatpush1.msra.mxu0 0.0
    %641 = vmatprep.subr.mxu0 0.0
    %642 = vmatpush1.msra.mxu0 0.0
    %643 = vmatprep.subr.mxu0 0.0
    %644 = vmatpush1.msra.mxu0 0.0
    %645 = vmatprep.subr.mxu0 0.0
    %646 = vmatpush1.msra.mxu0 0.0
    %647 = vmatprep.subr.mxu0 0.0
    %648 = vmatpush1.msra.mxu0 0.0
    %649 = vmatprep.subr.mxu0 0.0
    %650 = vmatpush1.msra.mxu0 0.0
    %651 = vmatprep.subr.mxu0 0.0
    %652 = vmatpush1.msra.mxu0 0.0
    %653 = vmatprep.subr.mxu0 0.0
    %654 = vmatpush1.msra.mxu0 %v622
    %655 = vmatprep.subr.mxu0 0.0
    %656 = vmatpush1.msra.mxu0 %v621
    %657 = vmatprep.subr.mxu0 0.0
    %658 = vmatpush1.msra.mxu0 %v620
    %659 = vmatprep.subr.mxu0 0.0
    %660 = vmatpush1.msra.mxu0 %v619
    %661 = vmatprep.subr.mxu0 0.0
    %662 = vmatpush2.msra.mxu0 0.0
    %663 = vmatprep.subr.mxu0 0.0
    %664 = vmatpush2.msra.mxu0 0.0
    %665 = vmatprep.subr.mxu0 0.0
    %666 = vmatpush2.msra.mxu0 0.0
    %667 = vmatprep.subr.mxu0 0.0
    %668 = vmatpush2.msra.mxu0 0.0
    %669 = vmatprep.subr.mxu0 0.0
    %670 = vmatpush2.msra.mxu0 0.0
    %671 = vmatprep.subr.mxu0 0.0
    %672 = vmatpush2.msra.mxu0 0.0
    %673 = vmatprep.subr.mxu0 0.0
    %674 = vmatpush2.msra.mxu0 0.0
    %675 = vmatprep.subr.mxu0 0.0
    %676 = vmatpush2.msra.mxu0 0.0
    %677 = vmatprep.subr.mxu0 0.0
    %678 = vmatpush2.msra.mxu0 0.0
    %679 = vmatprep.subr.mxu0 0.0
    %680 = vmatpush2.msra.mxu0 0.0
    %681 = vmatprep.subr.mxu0 0.0
    %682 = vmatpush2.msra.mxu0 0.0
    %683 = vmatprep.subr.mxu0 0.0
    %684 = vmatpush2.msra.mxu0 0.0
    %685 = vmatprep.subr.mxu0 0.0
    %686 = vmatpush2.msra.mxu0 0.0
    %687 = vmatprep.subr.mxu0 0.0
    %688 = vmatpush2.msra.mxu0 0.0
    %689 = vmatprep.subr.mxu0 0.0
    %690 = vmatpush2.msra.mxu0 0.0
    %691 = vmatprep.subr.mxu0 0.0
    %692 = vmatpush2.msra.mxu0 0.0
    %693 = vmatprep.mubr.f32.mxu0 0.0
    %694 = vmatmul.mubr.f32.gmra.mxu0 %v627
    %v695 = vpop.f32.mrf.mxu0
    %v696 = vadd.f32 0.0, %v695
    %v697 = vpop.f32.mrf.mxu0
    %698 = vdwg.mxu0
    %v699 = vrot.slane %v614, 7
    %v700 = vsel %vm198, %v699, %v613
    %v701 = vsel %vm85, %v700, 0
    %703 = vmatprep.subr.mxu0 0.0
    %704 = vmatpush1.msra.mxu0 0.0
    %705 = vmatprep.subr.mxu0 0.0
    %706 = vmatpush1.msra.mxu0 0.0
    %707 = vmatprep.subr.mxu0 0.0
    %708 = vmatpush1.msra.mxu0 0.0
    %709 = vmatprep.subr.mxu0 0.0
    %710 = vmatpush1.msra.mxu0 0.0
    %711 = vmatprep.subr.mxu0 0.0
    %712 = vmatpush1.msra.mxu0 0.0
    %713 = vmatprep.subr.mxu0 0.0
    %714 = vmatpush1.msra.mxu0 0.0
    %715 = vmatprep.subr.mxu0 0.0
    %716 = vmatpush1.msra.mxu0 0.0
    %717 = vmatprep.subr.mxu0 0.0
    %718 = vmatpush1.msra.mxu0 0.0
    %719 = vmatprep.subr.mxu0 0.0
    %720 = vmatpush1.msra.mxu0 0.0
    %721 = vmatprep.subr.mxu0 0.0
    %722 = vmatpush1.msra.mxu0 0.0
    %723 = vmatprep.subr.mxu0 0.0
    %724 = vmatpush1.msra.mxu0 0.0
    %725 = vmatprep.subr.mxu0 0.0
    %726 = vmatpush1.msra.mxu0 0.0
    %727 = vmatprep.subr.mxu0 0.0
    %728 = vmatpush1.msra.mxu0 %v618
    %729 = vmatprep.subr.mxu0 0.0
    %730 = vmatpush1.msra.mxu0 %v617
    %731 = vmatprep.subr.mxu0 0.0
    %732 = vmatpush1.msra.mxu0 %v616
    %733 = vmatprep.subr.mxu0 0.0
    %734 = vmatpush1.msra.mxu0 %v615
    %735 = vmatprep.subr.mxu0 0.0
    %736 = vmatpush2.msra.mxu0 0.0
    %737 = vmatprep.subr.mxu0 0.0
    %738 = vmatpush2.msra.mxu0 0.0
    %739 = vmatprep.subr.mxu0 0.0
    %740 = vmatpush2.msra.mxu0 0.0
    %741 = vmatprep.subr.mxu0 0.0
    %742 = vmatpush2.msra.mxu0 0.0
    %743 = vmatprep.subr.mxu0 0.0
    %744 = vmatpush2.msra.mxu0 0.0
    %745 = vmatprep.subr.mxu0 0.0
    %746 = vmatpush2.msra.mxu0 0.0
    %747 = vmatprep.subr.mxu0 0.0
    %748 = vmatpush2.msra.mxu0 0.0
    %749 = vmatprep.subr.mxu0 0.0
    %750 = vmatpush2.msra.mxu0 0.0
    %751 = vmatprep.subr.mxu0 0.0
    %752 = vmatpush2.msra.mxu0 0.0
    %753 = vmatprep.subr.mxu0 0.0
    %754 = vmatpush2.msra.mxu0 0.0
    %755 = vmatprep.subr.mxu0 0.0
    %756 = vmatpush2.msra.mxu0 0.0
    %757 = vmatprep.subr.mxu0 0.0
    %758 = vmatpush2.msra.mxu0 0.0
    %759 = vmatprep.subr.mxu0 0.0
    %760 = vmatpush2.msra.mxu0 0.0
    %761 = vmatprep.subr.mxu0 0.0
    %762 = vmatpush2.msra.mxu0 0.0
    %763 = vmatprep.subr.mxu0 0.0
    %764 = vmatpush2.msra.mxu0 0.0
    %765 = vmatprep.subr.mxu0 0.0
    %766 = vmatpush2.msra.mxu0 0.0
    %767 = vmatprep.mubr.f32.mxu0 0.0
    %768 = vmatmul.mubr.f32.gmra.mxu0 %v701
    %v769 = vpop.f32.mrf.mxu0
    %v770 = vadd.f32 %v696, %v769
    %v771 = vpop.f32.mrf.mxu0
    %772 = vdwg.mxu0
    %v773 = vld [vmem:[#allocation8 + $0x40] sm:$0xff]
    %v774 = vld [vmem:[#allocation8 + $0x48] sm:$0xff]
    %v775 = vld [vmem:[#allocation8 + $0x50] sm:$0xff]
    %v776 = vld [vmem:[#allocation8 + $0x58] sm:$0xff]
    %v777 = vrot.slane %v613, 2
    %v778 = vrot.slane %v614, 1
    %v779 = vsel %vm198, %v778, %v777
    %v780 = vsel %vm85, %v779, 0
    %782 = vmatprep.subr.mxu0 0.0
    %783 = vmatpush1.msra.mxu0 0.0
    %784 = vmatprep.subr.mxu0 0.0
    %785 = vmatpush1.msra.mxu0 0.0
    %786 = vmatprep.subr.mxu0 0.0
    %787 = vmatpush1.msra.mxu0 0.0
    %788 = vmatprep.subr.mxu0 0.0
    %789 = vmatpush1.msra.mxu0 0.0
    %790 = vmatprep.subr.mxu0 0.0
    %791 = vmatpush1.msra.mxu0 0.0
    %792 = vmatprep.subr.mxu0 0.0
    %793 = vmatpush1.msra.mxu0 0.0
    %794 = vmatprep.subr.mxu0 0.0
    %795 = vmatpush1.msra.mxu0 0.0
    %796 = vmatprep.subr.mxu0 0.0
    %797 = vmatpush1.msra.mxu0 0.0
    %798 = vmatprep.subr.mxu0 0.0
    %799 = vmatpush1.msra.mxu0 0.0
    %800 = vmatprep.subr.mxu0 0.0
    %801 = vmatpush1.msra.mxu0 0.0
    %802 = vmatprep.subr.mxu0 0.0
    %803 = vmatpush1.msra.mxu0 0.0
    %804 = vmatprep.subr.mxu0 0.0
    %805 = vmatpush1.msra.mxu0 0.0
    %806 = vmatprep.subr.mxu0 0.0
    %807 = vmatpush1.msra.mxu0 %v776
    %808 = vmatprep.subr.mxu0 0.0
    %809 = vmatpush1.msra.mxu0 %v775
    %810 = vmatprep.subr.mxu0 0.0
    %811 = vmatpush1.msra.mxu0 %v774
    %812 = vmatprep.subr.mxu0 0.0
    %813 = vmatpush1.msra.mxu0 %v773
    %814 = vmatprep.subr.mxu0 0.0
    %815 = vmatpush2.msra.mxu0 0.0
    %816 = vmatprep.subr.mxu0 0.0
    %817 = vmatpush2.msra.mxu0 0.0
    %818 = vmatprep.subr.mxu0 0.0
    %819 = vmatpush2.msra.mxu0 0.0
    %820 = vmatprep.subr.mxu0 0.0
    %821 = vmatpush2.msra.mxu0 0.0
    %822 = vmatprep.subr.mxu0 0.0
    %823 = vmatpush2.msra.mxu0 0.0
    %824 = vmatprep.subr.mxu0 0.0
    %825 = vmatpush2.msra.mxu0 0.0
    %826 = vmatprep.subr.mxu0 0.0
    %827 = vmatpush2.msra.mxu0 0.0
    %828 = vmatprep.subr.mxu0 0.0
    %829 = vmatpush2.msra.mxu0 0.0
    %830 = vmatprep.subr.mxu0 0.0
    %831 = vmatpush2.msra.mxu0 0.0
    %832 = vmatprep.subr.mxu0 0.0
    %833 = vmatpush2.msra.mxu0 0.0
    %834 = vmatprep.subr.mxu0 0.0
    %835 = vmatpush2.msra.mxu0 0.0
    %836 = vmatprep.subr.mxu0 0.0
    %837 = vmatpush2.msra.mxu0 0.0
    %838 = vmatprep.subr.mxu0 0.0
    %839 = vmatpush2.msra.mxu0 0.0
    %840 = vmatprep.subr.mxu0 0.0
    %841 = vmatpush2.msra.mxu0 0.0
    %842 = vmatprep.subr.mxu0 0.0
    %843 = vmatpush2.msra.mxu0 0.0
    %844 = vmatprep.subr.mxu0 0.0
    %845 = vmatpush2.msra.mxu0 0.0
    %846 = vmatprep.mubr.f32.mxu0 0.0
    %847 = vmatmul.mubr.f32.gmra.mxu0 %v780
    %v848 = vpop.f32.mrf.mxu0
    %v849 = vadd.f32 0.0, %v848
    %v850 = vpop.f32.mrf.mxu0
    %851 = vdwg.mxu0
    %v852 = vadd.f32 %v770, %v849
    %v853 = vld [vmem:[#allocation8 + $0x60] sm:$0xff]
    %v854 = vld [vmem:[#allocation8 + $0x68] sm:$0xff]
    %v855 = vld [vmem:[#allocation8 + $0x70] sm:$0xff]
    %v856 = vld [vmem:[#allocation8 + $0x78] sm:$0xff]
    %v857 = vrot.slane %v613, 3
    %v858 = vrot.slane %v614, 2
    %v859 = vsel %vm198, %v858, %v857
    %v860 = vsel %vm85, %v859, 0
    %862 = vmatprep.subr.mxu0 0.0
    %863 = vmatpush1.msra.mxu0 0.0
    %864 = vmatprep.subr.mxu0 0.0
    %865 = vmatpush1.msra.mxu0 0.0
    %866 = vmatprep.subr.mxu0 0.0
    %867 = vmatpush1.msra.mxu0 0.0
    %868 = vmatprep.subr.mxu0 0.0
    %869 = vmatpush1.msra.mxu0 0.0
    %870 = vmatprep.subr.mxu0 0.0
    %871 = vmatpush1.msra.mxu0 0.0
    %872 = vmatprep.subr.mxu0 0.0
    %873 = vmatpush1.msra.mxu0 0.0
    %874 = vmatprep.subr.mxu0 0.0
    %875 = vmatpush1.msra.mxu0 0.0
    %876 = vmatprep.subr.mxu0 0.0
    %877 = vmatpush1.msra.mxu0 0.0
    %878 = vmatprep.subr.mxu0 0.0
    %879 = vmatpush1.msra.mxu0 0.0
    %880 = vmatprep.subr.mxu0 0.0
    %881 = vmatpush1.msra.mxu0 0.0
    %882 = vmatprep.subr.mxu0 0.0
    %883 = vmatpush1.msra.mxu0 0.0
    %884 = vmatprep.subr.mxu0 0.0
    %885 = vmatpush1.msra.mxu0 0.0
    %886 = vmatprep.subr.mxu0 0.0
    %887 = vmatpush1.msra.mxu0 %v856
    %888 = vmatprep.subr.mxu0 0.0
    %889 = vmatpush1.msra.mxu0 %v855
    %890 = vmatprep.subr.mxu0 0.0
    %891 = vmatpush1.msra.mxu0 %v854
    %892 = vmatprep.subr.mxu0 0.0
    %893 = vmatpush1.msra.mxu0 %v853
    %894 = vmatprep.subr.mxu0 0.0
    %895 = vmatpush2.msra.mxu0 0.0
    %896 = vmatprep.subr.mxu0 0.0
    %897 = vmatpush2.msra.mxu0 0.0
    %898 = vmatprep.subr.mxu0 0.0
    %899 = vmatpush2.msra.mxu0 0.0
    %900 = vmatprep.subr.mxu0 0.0
    %901 = vmatpush2.msra.mxu0 0.0
    %902 = vmatprep.subr.mxu0 0.0
    %903 = vmatpush2.msra.mxu0 0.0
    %904 = vmatprep.subr.mxu0 0.0
    %905 = vmatpush2.msra.mxu0 0.0
    %906 = vmatprep.subr.mxu0 0.0
    %907 = vmatpush2.msra.mxu0 0.0
    %908 = vmatprep.subr.mxu0 0.0
    %909 = vmatpush2.msra.mxu0 0.0
    %910 = vmatprep.subr.mxu0 0.0
    %911 = vmatpush2.msra.mxu0 0.0
    %912 = vmatprep.subr.mxu0 0.0
    %913 = vmatpush2.msra.mxu0 0.0
    %914 = vmatprep.subr.mxu0 0.0
    %915 = vmatpush2.msra.mxu0 0.0
    %916 = vmatprep.subr.mxu0 0.0
    %917 = vmatpush2.msra.mxu0 0.0
    %918 = vmatprep.subr.mxu0 0.0
    %919 = vmatpush2.msra.mxu0 0.0
    %920 = vmatprep.subr.mxu0 0.0
    %921 = vmatpush2.msra.mxu0 0.0
    %922 = vmatprep.subr.mxu0 0.0
    %923 = vmatpush2.msra.mxu0 0.0
    %924 = vmatprep.subr.mxu0 0.0
    %925 = vmatpush2.msra.mxu0 0.0
    %926 = vmatprep.mubr.f32.mxu0 0.0
    %927 = vmatmul.mubr.f32.gmra.mxu0 %v860
    %v928 = vpop.f32.mrf.mxu0
    %v929 = vadd.f32 0.0, %v928
    %v930 = vpop.f32.mrf.mxu0
    %931 = vdwg.mxu0
    %v932 = vadd.f32 %v852, %v929
    %v933 = vld [vmem:[#allocation8 + $0x80] sm:$0xff]
    %v934 = vld [vmem:[#allocation8 + $0x88] sm:$0xff]
    %v935 = vld [vmem:[#allocation8 + $0x90] sm:$0xff]
    %v936 = vld [vmem:[#allocation8 + $0x98] sm:$0xff]
    %v937 = vrot.slane %v613, 4
    %v938 = vrot.slane %v614, 3
    %v939 = vsel %vm198, %v938, %v937
    %v940 = vsel %vm85, %v939, 0
    %942 = vmatprep.subr.mxu0 0.0
    %943 = vmatpush1.msra.mxu0 0.0
    %944 = vmatprep.subr.mxu0 0.0
    %945 = vmatpush1.msra.mxu0 0.0
    %946 = vmatprep.subr.mxu0 0.0
    %947 = vmatpush1.msra.mxu0 0.0
    %948 = vmatprep.subr.mxu0 0.0
    %949 = vmatpush1.msra.mxu0 0.0
    %950 = vmatprep.subr.mxu0 0.0
    %951 = vmatpush1.msra.mxu0 0.0
    %952 = vmatprep.subr.mxu0 0.0
    %953 = vmatpush1.msra.mxu0 0.0
    %954 = vmatprep.subr.mxu0 0.0
    %955 = vmatpush1.msra.mxu0 0.0
    %956 = vmatprep.subr.mxu0 0.0
    %957 = vmatpush1.msra.mxu0 0.0
    %958 = vmatprep.subr.mxu0 0.0
    %959 = vmatpush1.msra.mxu0 0.0
    %960 = vmatprep.subr.mxu0 0.0
    %961 = vmatpush1.msra.mxu0 0.0
    %962 = vmatprep.subr.mxu0 0.0
    %963 = vmatpush1.msra.mxu0 0.0
    %964 = vmatprep.subr.mxu0 0.0
    %965 = vmatpush1.msra.mxu0 0.0
    %966 = vmatprep.subr.mxu0 0.0
    %967 = vmatpush1.msra.mxu0 %v936
    %968 = vmatprep.subr.mxu0 0.0
    %969 = vmatpush1.msra.mxu0 %v935
    %970 = vmatprep.subr.mxu0 0.0
    %971 = vmatpush1.msra.mxu0 %v934
    %972 = vmatprep.subr.mxu0 0.0
    %973 = vmatpush1.msra.mxu0 %v933
    %974 = vmatprep.subr.mxu0 0.0
    %975 = vmatpush2.msra.mxu0 0.0
    %976 = vmatprep.subr.mxu0 0.0
    %977 = vmatpush2.msra.mxu0 0.0
    %978 = vmatprep.subr.mxu0 0.0
    %979 = vmatpush2.msra.mxu0 0.0
    %980 = vmatprep.subr.mxu0 0.0
    %981 = vmatpush2.msra.mxu0 0.0
    %982 = vmatprep.subr.mxu0 0.0
    %983 = vmatpush2.msra.mxu0 0.0
    %984 = vmatprep.subr.mxu0 0.0
    %985 = vmatpush2.msra.mxu0 0.0
    %986 = vmatprep.subr.mxu0 0.0
    %987 = vmatpush2.msra.mxu0 0.0
    %988 = vmatprep.subr.mxu0 0.0
    %989 = vmatpush2.msra.mxu0 0.0
    %990 = vmatprep.subr.mxu0 0.0
    %991 = vmatpush2.msra.mxu0 0.0
    %992 = vmatprep.subr.mxu0 0.0
    %993 = vmatpush2.msra.mxu0 0.0
    %994 = vmatprep.subr.mxu0 0.0
    %995 = vmatpush2.msra.mxu0 0.0
    %996 = vmatprep.subr.mxu0 0.0
    %997 = vmatpush2.msra.mxu0 0.0
    %998 = vmatprep.subr.mxu0 0.0
    %999 = vmatpush2.msra.mxu0 0.0
    %1000 = vmatprep.subr.mxu0 0.0
    %1001 = vmatpush2.msra.mxu0 0.0
    %1002 = vmatprep.subr.mxu0 0.0
    %1003 = vmatpush2.msra.mxu0 0.0
    %1004 = vmatprep.subr.mxu0 0.0
    %1005 = vmatpush2.msra.mxu0 0.0
    %1006 = vmatprep.mubr.f32.mxu0 0.0
    %1007 = vmatmul.mubr.f32.gmra.mxu0 %v940
    %v1008 = vpop.f32.mrf.mxu0
    %v1009 = vadd.f32 0.0, %v1008
    %v1010 = vpop.f32.mrf.mxu0
    %1011 = vdwg.mxu0
    %v1012 = vadd.f32 %v932, %v1009
    %v1013 = vld [vmem:[#allocation8 + $0xa0] sm:$0xff]
    %v1014 = vld [vmem:[#allocation8 + $0xa8] sm:$0xff]
    %v1015 = vld [vmem:[#allocation8 + $0xb0] sm:$0xff]
    %v1016 = vld [vmem:[#allocation8 + $0xb8] sm:$0xff]
    %v1017 = vrot.slane %v613, 5
    %v1018 = vrot.slane %v614, 4
    %v1019 = vsel %vm198, %v1018, %v1017
    %v1020 = vsel %vm85, %v1019, 0
    %1022 = vmatprep.subr.mxu0 0.0
    %1023 = vmatpush1.msra.mxu0 0.0
    %1024 = vmatprep.subr.mxu0 0.0
    %1025 = vmatpush1.msra.mxu0 0.0
    %1026 = vmatprep.subr.mxu0 0.0
    %1027 = vmatpush1.msra.mxu0 0.0
    %1028 = vmatprep.subr.mxu0 0.0
    %1029 = vmatpush1.msra.mxu0 0.0
    %1030 = vmatprep.subr.mxu0 0.0
    %1031 = vmatpush1.msra.mxu0 0.0
    %1032 = vmatprep.subr.mxu0 0.0
    %1033 = vmatpush1.msra.mxu0 0.0
    %1034 = vmatprep.subr.mxu0 0.0
    %1035 = vmatpush1.msra.mxu0 0.0
    %1036 = vmatprep.subr.mxu0 0.0
    %1037 = vmatpush1.msra.mxu0 0.0
    %1038 = vmatprep.subr.mxu0 0.0
    %1039 = vmatpush1.msra.mxu0 0.0
    %1040 = vmatprep.subr.mxu0 0.0
    %1041 = vmatpush1.msra.mxu0 0.0
    %1042 = vmatprep.subr.mxu0 0.0
    %1043 = vmatpush1.msra.mxu0 0.0
    %1044 = vmatprep.subr.mxu0 0.0
    %1045 = vmatpush1.msra.mxu0 0.0
    %1046 = vmatprep.subr.mxu0 0.0
    %1047 = vmatpush1.msra.mxu0 %v1016
    %1048 = vmatprep.subr.mxu0 0.0
    %1049 = vmatpush1.msra.mxu0 %v1015
    %1050 = vmatprep.subr.mxu0 0.0
    %1051 = vmatpush1.msra.mxu0 %v1014
    %1052 = vmatprep.subr.mxu0 0.0
    %1053 = vmatpush1.msra.mxu0 %v1013
    %1054 = vmatprep.subr.mxu0 0.0
    %1055 = vmatpush2.msra.mxu0 0.0
    %1056 = vmatprep.subr.mxu0 0.0
    %1057 = vmatpush2.msra.mxu0 0.0
    %1058 = vmatprep.subr.mxu0 0.0
    %1059 = vmatpush2.msra.mxu0 0.0
    %1060 = vmatprep.subr.mxu0 0.0
    %1061 = vmatpush2.msra.mxu0 0.0
    %1062 = vmatprep.subr.mxu0 0.0
    %1063 = vmatpush2.msra.mxu0 0.0
    %1064 = vmatprep.subr.mxu0 0.0
    %1065 = vmatpush2.msra.mxu0 0.0
    %1066 = vmatprep.subr.mxu0 0.0
    %1067 = vmatpush2.msra.mxu0 0.0
    %1068 = vmatprep.subr.mxu0 0.0
    %1069 = vmatpush2.msra.mxu0 0.0
    %1070 = vmatprep.subr.mxu0 0.0
    %1071 = vmatpush2.msra.mxu0 0.0
    %1072 = vmatprep.subr.mxu0 0.0
    %1073 = vmatpush2.msra.mxu0 0.0
    %1074 = vmatprep.subr.mxu0 0.0
    %1075 = vmatpush2.msra.mxu0 0.0
    %1076 = vmatprep.subr.mxu0 0.0
    %1077 = vmatpush2.msra.mxu0 0.0
    %1078 = vmatprep.subr.mxu0 0.0
    %1079 = vmatpush2.msra.mxu0 0.0
    %1080 = vmatprep.subr.mxu0 0.0
    %1081 = vmatpush2.msra.mxu0 0.0
    %1082 = vmatprep.subr.mxu0 0.0
    %1083 = vmatpush2.msra.mxu0 0.0
    %1084 = vmatprep.subr.mxu0 0.0
    %1085 = vmatpush2.msra.mxu0 0.0
    %1086 = vmatprep.mubr.f32.mxu0 0.0
    %1087 = vmatmul.mubr.f32.gmra.mxu0 %v1020
    %v1088 = vpop.f32.mrf.mxu0
    %v1089 = vadd.f32 0.0, %v1088
    %v1090 = vpop.f32.mrf.mxu0
    %1091 = vdwg.mxu0
    %v1092 = vadd.f32 %v1012, %v1089
    %v1093 = vld [vmem:[#allocation8 + $0xc0] sm:$0xff]
    %v1094 = vld [vmem:[#allocation8 + $0xc8] sm:$0xff]
    %v1095 = vld [vmem:[#allocation8 + $0xd0] sm:$0xff]
    %v1096 = vld [vmem:[#allocation8 + $0xd8] sm:$0xff]
    %v1097 = vrot.slane %v613, 6
    %v1098 = vrot.slane %v614, 5
    %v1099 = vsel %vm198, %v1098, %v1097
    %v1100 = vsel %vm85, %v1099, 0
    %1102 = vmatprep.subr.mxu0 0.0
    %1103 = vmatpush1.msra.mxu0 0.0
    %1104 = vmatprep.subr.mxu0 0.0
    %1105 = vmatpush1.msra.mxu0 0.0
    %1106 = vmatprep.subr.mxu0 0.0
    %1107 = vmatpush1.msra.mxu0 0.0
    %1108 = vmatprep.subr.mxu0 0.0
    %1109 = vmatpush1.msra.mxu0 0.0
    %1110 = vmatprep.subr.mxu0 0.0
    %1111 = vmatpush1.msra.mxu0 0.0
    %1112 = vmatprep.subr.mxu0 0.0
    %1113 = vmatpush1.msra.mxu0 0.0
    %1114 = vmatprep.subr.mxu0 0.0
    %1115 = vmatpush1.msra.mxu0 0.0
    %1116 = vmatprep.subr.mxu0 0.0
    %1117 = vmatpush1.msra.mxu0 0.0
    %1118 = vmatprep.subr.mxu0 0.0
    %1119 = vmatpush1.msra.mxu0 0.0
    %1120 = vmatprep.subr.mxu0 0.0
    %1121 = vmatpush1.msra.mxu0 0.0
    %1122 = vmatprep.subr.mxu0 0.0
    %1123 = vmatpush1.msra.mxu0 0.0
    %1124 = vmatprep.subr.mxu0 0.0
    %1125 = vmatpush1.msra.mxu0 0.0
    %1126 = vmatprep.subr.mxu0 0.0
    %1127 = vmatpush1.msra.mxu0 %v1096
    %1128 = vmatprep.subr.mxu0 0.0
    %1129 = vmatpush1.msra.mxu0 %v1095
    %1130 = vmatprep.subr.mxu0 0.0
    %1131 = vmatpush1.msra.mxu0 %v1094
    %1132 = vmatprep.subr.mxu0 0.0
    %1133 = vmatpush1.msra.mxu0 %v1093
    %1134 = vmatprep.subr.mxu0 0.0
    %1135 = vmatpush2.msra.mxu0 0.0
    %1136 = vmatprep.subr.mxu0 0.0
    %1137 = vmatpush2.msra.mxu0 0.0
    %1138 = vmatprep.subr.mxu0 0.0
    %1139 = vmatpush2.msra.mxu0 0.0
    %1140 = vmatprep.subr.mxu0 0.0
    %1141 = vmatpush2.msra.mxu0 0.0
    %1142 = vmatprep.subr.mxu0 0.0
    %1143 = vmatpush2.msra.mxu0 0.0
    %1144 = vmatprep.subr.mxu0 0.0
    %1145 = vmatpush2.msra.mxu0 0.0
    %1146 = vmatprep.subr.mxu0 0.0
    %1147 = vmatpush2.msra.mxu0 0.0
    %1148 = vmatprep.subr.mxu0 0.0
    %1149 = vmatpush2.msra.mxu0 0.0
    %1150 = vmatprep.subr.mxu0 0.0
    %1151 = vmatpush2.msra.mxu0 0.0
    %1152 = vmatprep.subr.mxu0 0.0
    %1153 = vmatpush2.msra.mxu0 0.0
    %1154 = vmatprep.subr.mxu0 0.0
    %1155 = vmatpush2.msra.mxu0 0.0
    %1156 = vmatprep.subr.mxu0 0.0
    %1157 = vmatpush2.msra.mxu0 0.0
    %1158 = vmatprep.subr.mxu0 0.0
    %1159 = vmatpush2.msra.mxu0 0.0
    %1160 = vmatprep.subr.mxu0 0.0
    %1161 = vmatpush2.msra.mxu0 0.0
    %1162 = vmatprep.subr.mxu0 0.0
    %1163 = vmatpush2.msra.mxu0 0.0
    %1164 = vmatprep.subr.mxu0 0.0
    %1165 = vmatpush2.msra.mxu0 0.0
    %1166 = vmatprep.mubr.f32.mxu0 0.0
    %1167 = vmatmul.mubr.f32.gmra.mxu0 %v1100
    %v1168 = vpop.f32.mrf.mxu0
    %v1169 = vadd.f32 0.0, %v1168
    %v1170 = vpop.f32.mrf.mxu0
    %1171 = vdwg.mxu0
    %v1172 = vadd.f32 %v1092, %v1169
    %v1173 = vld [vmem:[#allocation8 + $0xe0] sm:$0xff]
    %v1174 = vld [vmem:[#allocation8 + $0xe8] sm:$0xff]
    %v1175 = vld [vmem:[#allocation8 + $0xf0] sm:$0xff]
    %v1176 = vld [vmem:[#allocation8 + $0xf8] sm:$0xff]
    %v1177 = vrot.slane %v613, 7
    %v1178 = vrot.slane %v614, 6
    %v1179 = vsel %vm198, %v1178, %v1177
    %v1180 = vsel %vm85, %v1179, 0
    %1182 = vmatprep.subr.mxu0 0.0
    %1183 = vmatpush1.msra.mxu0 0.0
    %1184 = vmatprep.subr.mxu0 0.0
    %1185 = vmatpush1.msra.mxu0 0.0
    %1186 = vmatprep.subr.mxu0 0.0
    %1187 = vmatpush1.msra.mxu0 0.0
    %1188 = vmatprep.subr.mxu0 0.0
    %1189 = vmatpush1.msra.mxu0 0.0
    %1190 = vmatprep.subr.mxu0 0.0
    %1191 = vmatpush1.msra.mxu0 0.0
    %1192 = vmatprep.subr.mxu0 0.0
    %1193 = vmatpush1.msra.mxu0 0.0
    %1194 = vmatprep.subr.mxu0 0.0
    %1195 = vmatpush1.msra.mxu0 0.0
    %1196 = vmatprep.subr.mxu0 0.0
    %1197 = vmatpush1.msra.mxu0 0.0
    %1198 = vmatprep.subr.mxu0 0.0
    %1199 = vmatpush1.msra.mxu0 0.0
    %1200 = vmatprep.subr.mxu0 0.0
    %1201 = vmatpush1.msra.mxu0 0.0
    %1202 = vmatprep.subr.mxu0 0.0
    %1203 = vmatpush1.msra.mxu0 0.0
    %1204 = vmatprep.subr.mxu0 0.0
    %1205 = vmatpush1.msra.mxu0 0.0
    %1206 = vmatprep.subr.mxu0 0.0
    %1207 = vmatpush1.msra.mxu0 %v1176
    %1208 = vmatprep.subr.mxu0 0.0
    %1209 = vmatpush1.msra.mxu0 %v1175
    %1210 = vmatprep.subr.mxu0 0.0
    %1211 = vmatpush1.msra.mxu0 %v1174
    %1212 = vmatprep.subr.mxu0 0.0
    %1213 = vmatpush1.msra.mxu0 %v1173
    %1214 = vmatprep.subr.mxu0 0.0
    %1215 = vmatpush2.msra.mxu0 0.0
    %1216 = vmatprep.subr.mxu0 0.0
    %1217 = vmatpush2.msra.mxu0 0.0
    %1218 = vmatprep.subr.mxu0 0.0
    %1219 = vmatpush2.msra.mxu0 0.0
    %1220 = vmatprep.subr.mxu0 0.0
    %1221 = vmatpush2.msra.mxu0 0.0
    %1222 = vmatprep.subr.mxu0 0.0
    %1223 = vmatpush2.msra.mxu0 0.0
    %1224 = vmatprep.subr.mxu0 0.0
    %1225 = vmatpush2.msra.mxu0 0.0
    %1226 = vmatprep.subr.mxu0 0.0
    %1227 = vmatpush2.msra.mxu0 0.0
    %1228 = vmatprep.subr.mxu0 0.0
    %1229 = vmatpush2.msra.mxu0 0.0
    %1230 = vmatprep.subr.mxu0 0.0
    %1231 = vmatpush2.msra.mxu0 0.0
    %1232 = vmatprep.subr.mxu0 0.0
    %1233 = vmatpush2.msra.mxu0 0.0
    %1234 = vmatprep.subr.mxu0 0.0
    %1235 = vmatpush2.msra.mxu0 0.0
    %1236 = vmatprep.subr.mxu0 0.0
    %1237 = vmatpush2.msra.mxu0 0.0
    %1238 = vmatprep.subr.mxu0 0.0
    %1239 = vmatpush2.msra.mxu0 0.0
    %1240 = vmatprep.subr.mxu0 0.0
    %1241 = vmatpush2.msra.mxu0 0.0
    %1242 = vmatprep.subr.mxu0 0.0
    %1243 = vmatpush2.msra.mxu0 0.0
    %1244 = vmatprep.subr.mxu0 0.0
    %1245 = vmatpush2.msra.mxu0 0.0
    %1246 = vmatprep.mubr.f32.mxu0 0.0
    %1247 = vmatmul.mubr.f32.gmra.mxu0 %v1180
    %v1248 = vpop.f32.mrf.mxu0
    %v1249 = vadd.f32 0.0, %v1248
    %v1250 = vpop.f32.mrf.mxu0
    %1251 = vdwg.mxu0
    %v1252 = vadd.f32 %v1172, %v1249
    %v1253 = vld [vmem:[%s7 + $0x6] sm:$0x1]
    %v1254 = vlaneseq
    %v1255 = vshrl.u32 %v1254, 7
    %v1256 = vsub.s32 0, %v1255
    %v1257 = vrot.slane %v1253, %v1256
    %v1258 = vadd.f32 %v1252, %v1257
    %1259 = vst [vmem:[#allocation10] sm:$0x3] %v1258
    // Predicated region
    $region50: #{tpu_custom_call.1} parent=1 // pred_check
      _
    $region51: #{tpu_custom_call.1} parent=1 // pred_check_branch
      %1261 = sbr.rel (0) target = $region53
    $region52: #{tpu_custom_call.1} parent=1 // pred_region
      %s1263 = ssub.s32 32, 32
      %1264 = vsyncadd [#allocation4], %s1263
      %s1266 = sshll.u32 [#allocation10], 4
      %s1267 = int_to_ptr.vmem [resolvable:$true] %s1266
      %1269 = dma.vmem_to_hbm [thread:$0]  %s1267, 32, %s8, [#allocation4]
    $region53: #{tpu_custom_call.1} parent=1 // pred_fallthru
      _
    // Predicated region
    $region54: #{tpu_custom_call.1} parent=1 // pred_check
      _
    $region55: #{tpu_custom_call.1} parent=1 // pred_check_branch
      %1271 = sbr.rel (0) target = $region57
    $region56: #{tpu_custom_call.1} parent=1 // pred_region
      %1272 = dma.done [#allocation4], 32
    $region57: #{tpu_custom_call.1} parent=1 // pred_fallthru
      _
    %1273 = vsyncpa [#allocation3], 1
    %1274 = vsyncpa [#allocation6], 1
    %1275 = vsyncpa [#allocation9], 1
    %1276 = vsyncpa [#allocation4], 1

</llo_original>
